<compile_context>
chip_gen: v5e
topology: v5e:2x2
jax: 0.10.0
libtpu: 0.0.40
codegen_flags: <defaults>
</compile_context>

<pallas_src>
import functools
import math

import jax
import jax.numpy as jnp
from jax import lax
from jax.experimental import pallas as pl
from jax.experimental.pallas import tpu as pltpu

_MIB = 1024 * 1024


def _mha_kernel(q_ref, k_ref, v_ref,
                wq_ref, wk_ref, wv_ref,
                bq_ref, bk_ref, bv_ref,
                ctx_ref, attn_ref,
                kh_scratch, vh_scratch, ctx_scratch,
                *, scale, n_heads):
    qi = pl.program_id(1)
    compute_dtype = kh_scratch.dtype   # == input dtype (bf16 stays bf16 on MXU)

    # Project K and V once per batch (first query tile); keep in VMEM scratch
    # in the compute dtype so the per-head score / P.V matmuls get native-rate
    # MXU operands and scratch residency is halved for bf16 inputs.
    @pl.when(qi == 0)
    def _():
        k = k_ref[0]                                        # (T, D)
        v = v_ref[0]                                        # (T, D)
        kh_scratch[...] = (
            jnp.dot(k, wk_ref[...], preferred_element_type=jnp.float32)
            + bk_ref[...]).astype(compute_dtype)
        vh_scratch[...] = (
            jnp.dot(v, wv_ref[...], preferred_element_type=jnp.float32)
            + bv_ref[...]).astype(compute_dtype)

    # Q projection for this query tile; fold 1/sqrt(Dh) into the (tq, D)
    # projection instead of scaling the (tq, T) scores.
    q = q_ref[0]                                            # (tq, D)
    qh_all = ((jnp.dot(q, wq_ref[...], preferred_element_type=jnp.float32)
               + bq_ref[...]) * scale).astype(compute_dtype)   # (tq, D)

    kh_all = kh_scratch[...]                                # (T, D)
    vh_all = vh_scratch[...]                                # (T, D)
    dh = qh_all.shape[-1] // n_heads

    # Static unroll over heads (H is small).  Each head's results are stored
    # straight to refs, bounding the (tq, T) f32 temporaries to one head.
    for h in range(n_heads):
        sl = slice(h * dh, (h + 1) * dh)
        qh = qh_all[:, sl]                                  # (tq, Dh)
        kh = kh_all[:, sl]                                  # (T, Dh)
        vh = vh_all[:, sl]                                  # (T, Dh)
        # scores = qh @ kh^T via contracting-last-dims dot (no in-kernel .T).
        s = lax.dot_general(qh, kh, (((1,), (1,)), ((), ())),
                            preferred_element_type=jnp.float32)   # (tq, T)
        s = s - jnp.max(s, axis=-1, keepdims=True)
        e = jnp.exp(s)
        a = e * pl.reciprocal(jnp.sum(e, axis=-1, keepdims=True), approx=True)
        attn_ref[h, 0] = a.astype(attn_ref.dtype)
        # Native-dtype operands for the P.V matmul, f32 accumulation.
        ctx_scratch[:, sl] = jnp.dot(a.astype(compute_dtype), vh,
                                     preferred_element_type=jnp.float32)

    # One lane-dense (tq, D) store, already in the PyTorch context layout.
    ctx_ref[0] = ctx_scratch[...].astype(ctx_ref.dtype)


def _vmem_limits():
    """Generation-aware (vmem_limit_bytes, tile_budget_bytes)."""
    try:
        cap = int(pltpu.get_tpu_info().vmem_capacity_bytes)
    except Exception:
        cap = 64 * _MIB                       # conservative (v7x per-core)
    cap = max(cap, 32 * _MIB)
    # v5e/v6e (128 MiB) -> 110 MiB limit; v7x (64 MiB) -> 48 MiB limit.
    vmem_limit = int(min(cap - 16 * _MIB, 110 * _MIB))
    tile_budget = max(vmem_limit - 8 * _MIB, 16 * _MIB)
    return vmem_limit, tile_budget


def _pick_q_tile(seq_len, d_model, n_heads, in_itemsize, cd_itemsize, budget):
    """Largest query tile (divisor of T) keeping total VMEM residency under
    `budget`: double-buffered attn/ctx/q blocks + full-T K/V scratch and
    k/v input buffers + weights + f32 softmax temporaries."""
    cands = sorted({c for c in (seq_len, 2048, 1024, 512, 256, 128, 64, 32, 16, 8)
                    if 0 < c <= seq_len and seq_len % c == 0}, reverse=True)
    fixed = (2 * seq_len * d_model * cd_itemsize        # kh/vh projection scratch
             + 4 * seq_len * d_model * in_itemsize      # double-buffered k/v blocks
             + 6 * d_model * d_model * in_itemsize      # weights (conservative 2x)
             + 6 * d_model * in_itemsize)               # biases

    def per_tq(t):
        return (2 * n_heads * t * seq_len * in_itemsize   # attn out (double-buffered)
                + 4 * t * d_model * in_itemsize           # q in + ctx out (dbl-buffered)
                + t * d_model * 4                         # ctx f32 scratch
                + 3 * t * seq_len * 4)                    # softmax f32 temporaries

    for c in cands:
        if fixed + per_tq(c) <= budget:
            return c
    return cands[-1]


def multi_head_attention(q, k, v, params, n_heads):
    """Returns (context (B, T, H*Dh), attn (H*B, T, T)) matching PyTorch."""
    B, T, D = q.shape
    assert D % n_heads == 0
    Dh = D // n_heads
    scale = 1.0 / math.sqrt(Dh)

    # Pre-transpose PyTorch nn.Linear weights (out, in) -> (in, out): kernel
    # computes x @ W_T with no in-kernel transpose.  Free layout plumbing.
    wq_t = jnp.transpose(params["wq"])
    wk_t = jnp.transpose(params["wk"])
    wv_t = jnp.transpose(params["wv"])
    bq = params["bq"].reshape(1, D)
    bk = params["bk"].reshape(1, D)
    bv = params["bv"].reshape(1, D)

    # MXU operand dtype == input dtype (bf16 inputs -> bf16 matmul operands;
    # f32 inputs stay f32 so reference parity is exact).
    compute_dtype = q.dtype
    in_itemsize = jnp.dtype(q.dtype).itemsize
    cd_itemsize = jnp.dtype(compute_dtype).itemsize

    vmem_limit, tile_budget = _vmem_limits()
    tq = _pick_q_tile(T, D, n_heads, in_itemsize, cd_itemsize, tile_budget)
    nq = T // tq

    kernel = functools.partial(_mha_kernel, scale=scale, n_heads=n_heads)

    def run(single_buffer_constants):
        # Constant-index operands waste their second pipeline buffer; request
        # single buffering when supported.
        const_kw = ({"pipeline_mode": pl.Buffered(1)}
                    if single_buffer_constants else {})
        q_spec = pl.BlockSpec((1, tq, D), lambda b, qi: (b, qi, 0))
        kv_spec = pl.BlockSpec((1, T, D), lambda b, qi: (b, 0, 0))   # const over qi
        w_spec = pl.BlockSpec((D, D), lambda b, qi: (0, 0), **const_kw)
        b_spec = pl.BlockSpec((1, D), lambda b, qi: (0, 0), **const_kw)
        return pl.pallas_call(
            kernel,
            out_shape=(
                jax.ShapeDtypeStruct((B, T, D), q.dtype),
                jax.ShapeDtypeStruct((n_heads, B, T, T), q.dtype),
            ),
            grid_spec=pltpu.PrefetchScalarGridSpec(
                num_scalar_prefetch=0,
                grid=(B, nq),
                in_specs=[q_spec, kv_spec, kv_spec,
                          w_spec, w_spec, w_spec,
                          b_spec, b_spec, b_spec],
                out_specs=[
                    pl.BlockSpec((1, tq, D), lambda b, qi: (b, qi, 0)),
                    pl.BlockSpec((n_heads, 1, tq, T), lambda b, qi: (0, b, qi, 0)),
                ],
                scratch_shapes=[
                    pltpu.VMEM((T, D), compute_dtype),   # K projection, per batch
                    pltpu.VMEM((T, D), compute_dtype),   # V projection, per batch
                    pltpu.VMEM((tq, D), jnp.float32),    # per-tile context staging
                ],
            ),
            compiler_params=pltpu.CompilerParams(
                # qi must stay "arbitrary": the K/V scratch is initialized at
                # qi == 0 and reused sequentially across query tiles.
                dimension_semantics=("parallel", "arbitrary"),
                vmem_limit_bytes=vmem_limit),
        )(q, k, v, wq_t, wk_t, wv_t, bq, bk, bv)

    try:
        ctx, attn_hbtt = run(True)
    except Exception:
        # Fallback if this JAX/Mosaic build rejects pl.Buffered(1) on
        # top-level pallas_call operands.
        ctx, attn_hbtt = run(False)

    # (H, B, T, T) -> (H*B, T, T): head-major flatten, a free reshape matching
    # PyTorch's permute(2,0,1,3).contiguous().view(H*B, T, Dh) ordering.
    attn = attn_hbtt.reshape(n_heads * B, T, T)
    return ctx, attn


def _reference(q, k, v, params, n_heads):
    """Plain-JAX replica of the PyTorch forward (eval mode) for sanity check."""
    B, T, D = q.shape
    Dh = D // n_heads

    def proj(x, w, b):
        y = x @ w.T + b                                  # (B, T, D)
        y = y.reshape(B, T, n_heads, Dh)
        y = jnp.transpose(y, (2, 0, 1, 3)).reshape(n_heads * B, T, Dh)
        return y

    Q = proj(q, params["wq"], params["bq"])
    K = proj(k, params["wk"], params["bk"])
    V = proj(v, params["wv"], params["bv"])
    score = jnp.einsum("bij,bkj->bik", Q, K) / math.sqrt(Dh)
    attn = jax.nn.softmax(score, axis=-1)
    ctx = jnp.einsum("bik,bkd->bid", attn, V)            # (H*B, T, Dh)
    ctx = ctx.reshape(n_heads, B, T, Dh)
    ctx = jnp.transpose(ctx, (1, 2, 0, 3)).reshape(B, T, n_heads * Dh)
    return ctx, attn


if __name__ == "__main__":
    d_model, n_heads = 32, 4
    B, T = 2, 8

    key = jax.random.PRNGKey(0)
    ks = jax.random.split(key, 9)
    bound = 1.0 / math.sqrt(d_model)
    params = {
        "wq": jax.random.uniform(ks[0], (d_model, d_model), jnp.float32, -bound, bound),
        "wk": jax.random.uniform(ks[1], (d_model, d_model), jnp.float32, -bound, bound),
        "wv": jax.random.uniform(ks[2], (d_model, d_model), jnp.float32, -bound, bound),
        "bq": jax.random.uniform(ks[3], (d_model,), jnp.float32, -bound, bound),
        "bk": jax.random.uniform(ks[4], (d_model,), jnp.float32, -bound, bound),
        "bv": jax.random.uniform(ks[5], (d_model,), jnp.float32, -bound, bound),
    }
    q = jax.random.normal(ks[6], (B, T, d_model), jnp.float32)
    k = jax.random.normal(ks[7], (B, T, d_model), jnp.float32)
    v = jax.random.normal(ks[8], (B, T, d_model), jnp.float32)

    context, attn = multi_head_attention(q, k, v, params, n_heads)
    context = jax.block_until_ready(context)
    attn = jax.block_until_ready(attn)

    ctx_ref, attn_ref = _reference(q, k, v, params, n_heads)
    assert context.shape == (B, T, d_model)
    assert attn.shape == (n_heads * B, T, T)
    # Tolerance covers the EUP approximate-reciprocal softmax denominator.
    assert jnp.allclose(context, ctx_ref, atol=2e-3, rtol=2e-3)
    assert jnp.allclose(attn, attn_ref, atol=2e-3, rtol=2e-3)

    print("KERNEL_OK")
</pallas_src>

<mosaic_0001>
module attributes {stable_mosaic.version = 11 : i64} {
  func.func @_mha_kernel(%arg0: i32, %arg1: i32, %arg2: memref<1x8x32xf32, #tpu.memory_space<vmem>>, %arg3: memref<1x8x32xf32, #tpu.memory_space<vmem>>, %arg4: memref<1x8x32xf32, #tpu.memory_space<vmem>>, %arg5: memref<32x32xf32, #tpu.memory_space<vmem>>, %arg6: memref<32x32xf32, #tpu.memory_space<vmem>>, %arg7: memref<32x32xf32, #tpu.memory_space<vmem>>, %arg8: memref<1x32xf32, #tpu.memory_space<vmem>>, %arg9: memref<1x32xf32, #tpu.memory_space<vmem>>, %arg10: memref<1x32xf32, #tpu.memory_space<vmem>>, %arg11: memref<1x8x32xf32, #tpu.memory_space<vmem>>, %arg12: memref<4x1x8x8xf32, #tpu.memory_space<vmem>>, %arg13: memref<8x32xf32, #tpu.memory_space<vmem>>, %arg14: memref<8x32xf32, #tpu.memory_space<vmem>>, %arg15: memref<8x32xf32, #tpu.memory_space<vmem>>) attributes {dimension_semantics = [#tpu.dimension_semantics<parallel>, #tpu.dimension_semantics<arbitrary>], iteration_bounds = array<i64: 2, 1>, scalar_prefetch = 0 : i64, scratch_operands = 3 : i64, tpu.core_type = #tpu.core_type<tc>, window_params = [{transform_indices = @transform_0, window_bounds = array<i64: 1, 8, 32>}, {transform_indices = @transform_1, window_bounds = array<i64: 1, 8, 32>}, {transform_indices = @transform_2, window_bounds = array<i64: 1, 8, 32>}, {pipeline_mode = #tpu.pipeline_mode<synchronous>, transform_indices = @transform_3, window_bounds = array<i64: 32, 32>}, {pipeline_mode = #tpu.pipeline_mode<synchronous>, transform_indices = @transform_4, window_bounds = array<i64: 32, 32>}, {pipeline_mode = #tpu.pipeline_mode<synchronous>, transform_indices = @transform_5, window_bounds = array<i64: 32, 32>}, {pipeline_mode = #tpu.pipeline_mode<synchronous>, transform_indices = @transform_6, window_bounds = array<i64: 1, 32>}, {pipeline_mode = #tpu.pipeline_mode<synchronous>, transform_indices = @transform_7, window_bounds = array<i64: 1, 32>}, {pipeline_mode = #tpu.pipeline_mode<synchronous>, transform_indices = @transform_8, window_bounds = array<i64: 1, 32>}, {transform_indices = @transform_9, window_bounds = array<i64: 1, 8, 32>}, {transform_indices = @transform_10, window_bounds = array<i64: 4, 1, 8, 8>}]} {
    %c0_i32 = arith.constant 0 : i32
    %0 = arith.cmpi eq, %arg1, %c0_i32 : i32
    %1 = arith.extui %0 : i1 to i32
    %c0_i32_0 = arith.constant 0 : i32
    %2 = arith.cmpi ne, %1, %c0_i32_0 : i32
    scf.if %2 {
      %c0_51 = arith.constant 0 : index
      %c0_52 = arith.constant 0 : index
      %c0_53 = arith.constant 0 : index
      %94 = vector.load %arg3[%c0_51, %c0_52, %c0_53] : memref<1x8x32xf32, #tpu.memory_space<vmem>>, vector<1x8x32xf32>
      %95 = vector.shape_cast %94 : vector<1x8x32xf32> to vector<8x32xf32>
      %c0_54 = arith.constant 0 : index
      %c0_55 = arith.constant 0 : index
      %c0_56 = arith.constant 0 : index
      %96 = vector.load %arg4[%c0_54, %c0_55, %c0_56] : memref<1x8x32xf32, #tpu.memory_space<vmem>>, vector<1x8x32xf32>
      %97 = vector.shape_cast %96 : vector<1x8x32xf32> to vector<8x32xf32>
      %c0_57 = arith.constant 0 : index
      %c0_58 = arith.constant 0 : index
      %98 = vector.load %arg6[%c0_57, %c0_58] : memref<32x32xf32, #tpu.memory_space<vmem>>, vector<32x32xf32>
      %cst_59 = arith.constant dense<0.000000e+00> : vector<8x32xf32>
      %99 = tpu.matmul %95, %98, %cst_59 {dimension_numbers = #tpu.dot_dimension_numbers<[1], [0], [0], [1], [0, 0, 1, 1], [], []>} : vector<8x32xf32>, vector<32x32xf32>, vector<8x32xf32> -> vector<8x32xf32>
      %c0_60 = arith.constant 0 : index
      %c0_61 = arith.constant 0 : index
      %100 = vector.load %arg9[%c0_60, %c0_61] : memref<1x32xf32, #tpu.memory_space<vmem>>, vector<1x32xf32>
      %101 = vector.broadcast %100 : vector<1x32xf32> to vector<8x32xf32>
      %102 = arith.addf %99, %101 : vector<8x32xf32>
      %c0_62 = arith.constant 0 : index
      %c0_63 = arith.constant 0 : index
      %103 = vector.load %arg13[%c0_62, %c0_63] : memref<8x32xf32, #tpu.memory_space<vmem>>, vector<8x32xf32>
      tpu.vector_store %arg13[%c0_62, %c0_63], %102 {strides = array<i32>} : memref<8x32xf32, #tpu.memory_space<vmem>>, vector<8x32xf32>,
      %c0_64 = arith.constant 0 : index
      %c0_65 = arith.constant 0 : index
      %104 = vector.load %arg7[%c0_64, %c0_65] : memref<32x32xf32, #tpu.memory_space<vmem>>, vector<32x32xf32>
      %cst_66 = arith.constant dense<0.000000e+00> : vector<8x32xf32>
      %105 = tpu.matmul %97, %104, %cst_66 {dimension_numbers = #tpu.dot_dimension_numbers<[1], [0], [0], [1], [0, 0, 1, 1], [], []>} : vector<8x32xf32>, vector<32x32xf32>, vector<8x32xf32> -> vector<8x32xf32>
      %c0_67 = arith.constant 0 : index
      %c0_68 = arith.constant 0 : index
      %106 = vector.load %arg10[%c0_67, %c0_68] : memref<1x32xf32, #tpu.memory_space<vmem>>, vector<1x32xf32>
      %107 = vector.broadcast %106 : vector<1x32xf32> to vector<8x32xf32>
      %108 = arith.addf %105, %107 : vector<8x32xf32>
      %c0_69 = arith.constant 0 : index
      %c0_70 = arith.constant 0 : index
      %109 = vector.load %arg14[%c0_69, %c0_70] : memref<8x32xf32, #tpu.memory_space<vmem>>, vector<8x32xf32>
      tpu.vector_store %arg14[%c0_69, %c0_70], %108 {strides = array<i32>} : memref<8x32xf32, #tpu.memory_space<vmem>>, vector<8x32xf32>,
    } else {
    }
    %c0 = arith.constant 0 : index
    %c0_1 = arith.constant 0 : index
    %c0_2 = arith.constant 0 : index
    %3 = vector.load %arg2[%c0, %c0_1, %c0_2] : memref<1x8x32xf32, #tpu.memory_space<vmem>>, vector<1x8x32xf32>
    %4 = vector.shape_cast %3 : vector<1x8x32xf32> to vector<8x32xf32>
    %c0_3 = arith.constant 0 : index
    %c0_4 = arith.constant 0 : index
    %5 = vector.load %arg5[%c0_3, %c0_4] : memref<32x32xf32, #tpu.memory_space<vmem>>, vector<32x32xf32>
    %cst = arith.constant dense<0.000000e+00> : vector<8x32xf32>
    %6 = tpu.matmul %4, %5, %cst {dimension_numbers = #tpu.dot_dimension_numbers<[1], [0], [0], [1], [0, 0, 1, 1], [], []>} : vector<8x32xf32>, vector<32x32xf32>, vector<8x32xf32> -> vector<8x32xf32>
    %c0_5 = arith.constant 0 : index
    %c0_6 = arith.constant 0 : index
    %7 = vector.load %arg8[%c0_5, %c0_6] : memref<1x32xf32, #tpu.memory_space<vmem>>, vector<1x32xf32>
    %8 = vector.broadcast %7 : vector<1x32xf32> to vector<8x32xf32>
    %9 = arith.addf %6, %8 : vector<8x32xf32>
    %cst_7 = arith.constant 0.353553385 : f32
    %10 = vector.broadcast %cst_7 : f32 to vector<8x32xf32>
    %11 = arith.mulf %9, %10 : vector<8x32xf32>
    %c0_8 = arith.constant 0 : index
    %c0_9 = arith.constant 0 : index
    %12 = vector.load %arg13[%c0_8, %c0_9] : memref<8x32xf32, #tpu.memory_space<vmem>>, vector<8x32xf32>
    %c0_10 = arith.constant 0 : index
    %c0_11 = arith.constant 0 : index
    %13 = vector.load %arg14[%c0_10, %c0_11] : memref<8x32xf32, #tpu.memory_space<vmem>>, vector<8x32xf32>
    %14 = vector.extract_strided_slice %11 {offsets = [0, 0], sizes = [8, 8], strides = [1, 1]} : vector<8x32xf32> to vector<8x8xf32>
    %15 = vector.extract_strided_slice %12 {offsets = [0, 0], sizes = [8, 8], strides = [1, 1]} : vector<8x32xf32> to vector<8x8xf32>
    %16 = vector.extract_strided_slice %13 {offsets = [0, 0], sizes = [8, 8], strides = [1, 1]} : vector<8x32xf32> to vector<8x8xf32>
    %cst_12 = arith.constant dense<0.000000e+00> : vector<8x8xf32>
    %17 = tpu.matmul %14, %15, %cst_12 {dimension_numbers = #tpu.dot_dimension_numbers<[1], [1], [0], [0], [0, 0, 1, 0], [], []>} : vector<8x8xf32>, vector<8x8xf32>, vector<8x8xf32> -> vector<8x8xf32>
    %cst_13 = arith.constant dense<0xFF800000> : vector<8xf32>
    %18 = vector.multi_reduction <maximumf>, %17, %cst_13 [1] : vector<8x8xf32> to vector<8xf32>
    %19 = vector.shape_cast %18 : vector<8xf32> to vector<8x1xf32>
    %20 = vector.broadcast %19 : vector<8x1xf32> to vector<8x8xf32>
    %21 = arith.subf %17, %20 : vector<8x8xf32>
    %22 = math.exp %21 : vector<8x8xf32>
    %cst_14 = arith.constant dense<0.000000e+00> : vector<8xf32>
    %23 = vector.multi_reduction <add>, %22, %cst_14 [1] : vector<8x8xf32> to vector<8xf32>
    %24 = vector.shape_cast %23 : vector<8xf32> to vector<8x1xf32>
    %25 = tpu.reciprocal %24 {approx = true} : vector<8x1xf32> -> vector<8x1xf32>
    %26 = vector.broadcast %25 : vector<8x1xf32> to vector<8x8xf32>
    %27 = arith.mulf %22, %26 : vector<8x8xf32>
    %c0_15 = arith.constant 0 : index
    %c0_16 = arith.constant 0 : index
    %c0_17 = arith.constant 0 : index
    %c0_18 = arith.constant 0 : index
    %28 = vector.load %arg12[%c0_15, %c0_16, %c0_17, %c0_18] : memref<4x1x8x8xf32, #tpu.memory_space<vmem>>, vector<1x1x8x8xf32>
    %29 = vector.shape_cast %28 : vector<1x1x8x8xf32> to vector<8x8xf32>
    %30 = vector.shape_cast %27 : vector<8x8xf32> to vector<1x1x8x8xf32>
    tpu.vector_store %arg12[%c0_15, %c0_16, %c0_17, %c0_18], %30 {strides = array<i32>} : memref<4x1x8x8xf32, #tpu.memory_space<vmem>>, vector<1x1x8x8xf32>,
    %cst_19 = arith.constant dense<0.000000e+00> : vector<8x8xf32>
    %31 = tpu.matmul %27, %16, %cst_19 {dimension_numbers = #tpu.dot_dimension_numbers<[1], [0], [0], [1], [0, 0, 1, 1], [], []>} : vector<8x8xf32>, vector<8x8xf32>, vector<8x8xf32> -> vector<8x8xf32>
    %c0_20 = arith.constant 0 : index
    %c0_21 = arith.constant 0 : index
    %32 = vector.load %arg15[%c0_20, %c0_21] : memref<8x32xf32, #tpu.memory_space<vmem>>, vector<8x8xf32>
    tpu.vector_store %arg15[%c0_20, %c0_21], %31 {strides = array<i32>} : memref<8x32xf32, #tpu.memory_space<vmem>>, vector<8x8xf32>,
    %33 = vector.extract_strided_slice %11 {offsets = [0, 8], sizes = [8, 8], strides = [1, 1]} : vector<8x32xf32> to vector<8x8xf32>
    %34 = vector.extract_strided_slice %12 {offsets = [0, 8], sizes = [8, 8], strides = [1, 1]} : vector<8x32xf32> to vector<8x8xf32>
    %35 = vector.extract_strided_slice %13 {offsets = [0, 8], sizes = [8, 8], strides = [1, 1]} : vector<8x32xf32> to vector<8x8xf32>
    %cst_22 = arith.constant dense<0.000000e+00> : vector<8x8xf32>
    %36 = tpu.matmul %33, %34, %cst_22 {dimension_numbers = #tpu.dot_dimension_numbers<[1], [1], [0], [0], [0, 0, 1, 0], [], []>} : vector<8x8xf32>, vector<8x8xf32>, vector<8x8xf32> -> vector<8x8xf32>
    %cst_23 = arith.constant dense<0xFF800000> : vector<8xf32>
    %37 = vector.multi_reduction <maximumf>, %36, %cst_23 [1] : vector<8x8xf32> to vector<8xf32>
    %38 = vector.shape_cast %37 : vector<8xf32> to vector<8x1xf32>
    %39 = vector.broadcast %38 : vector<8x1xf32> to vector<8x8xf32>
    %40 = arith.subf %36, %39 : vector<8x8xf32>
    %41 = math.exp %40 : vector<8x8xf32>
    %cst_24 = arith.constant dense<0.000000e+00> : vector<8xf32>
    %42 = vector.multi_reduction <add>, %41, %cst_24 [1] : vector<8x8xf32> to vector<8xf32>
    %43 = vector.shape_cast %42 : vector<8xf32> to vector<8x1xf32>
    %44 = tpu.reciprocal %43 {approx = true} : vector<8x1xf32> -> vector<8x1xf32>
    %45 = vector.broadcast %44 : vector<8x1xf32> to vector<8x8xf32>
    %46 = arith.mulf %41, %45 : vector<8x8xf32>
    %c1 = arith.constant 1 : index
    %c0_25 = arith.constant 0 : index
    %c0_26 = arith.constant 0 : index
    %c0_27 = arith.constant 0 : index
    %47 = vector.load %arg12[%c1, %c0_25, %c0_26, %c0_27] : memref<4x1x8x8xf32, #tpu.memory_space<vmem>>, vector<1x1x8x8xf32>
    %48 = vector.shape_cast %47 : vector<1x1x8x8xf32> to vector<8x8xf32>
    %49 = vector.shape_cast %46 : vector<8x8xf32> to vector<1x1x8x8xf32>
    tpu.vector_store %arg12[%c1, %c0_25, %c0_26, %c0_27], %49 {strides = array<i32>} : memref<4x1x8x8xf32, #tpu.memory_space<vmem>>, vector<1x1x8x8xf32>,
    %cst_28 = arith.constant dense<0.000000e+00> : vector<8x8xf32>
    %50 = tpu.matmul %46, %35, %cst_28 {dimension_numbers = #tpu.dot_dimension_numbers<[1], [0], [0], [1], [0, 0, 1, 1], [], []>} : vector<8x8xf32>, vector<8x8xf32>, vector<8x8xf32> -> vector<8x8xf32>
    %c0_29 = arith.constant 0 : index
    %c8 = arith.constant 8 : index
    %51 = vector.load %arg15[%c0_29, %c8] : memref<8x32xf32, #tpu.memory_space<vmem>>, vector<8x8xf32>
    tpu.vector_store %arg15[%c0_29, %c8], %50 {strides = array<i32>} : memref<8x32xf32, #tpu.memory_space<vmem>>, vector<8x8xf32>,
    %52 = vector.extract_strided_slice %11 {offsets = [0, 16], sizes = [8, 8], strides = [1, 1]} : vector<8x32xf32> to vector<8x8xf32>
    %53 = vector.extract_strided_slice %12 {offsets = [0, 16], sizes = [8, 8], strides = [1, 1]} : vector<8x32xf32> to vector<8x8xf32>
    %54 = vector.extract_strided_slice %13 {offsets = [0, 16], sizes = [8, 8], strides = [1, 1]} : vector<8x32xf32> to vector<8x8xf32>
    %cst_30 = arith.constant dense<0.000000e+00> : vector<8x8xf32>
    %55 = tpu.matmul %52, %53, %cst_30 {dimension_numbers = #tpu.dot_dimension_numbers<[1], [1], [0], [0], [0, 0, 1, 0], [], []>} : vector<8x8xf32>, vector<8x8xf32>, vector<8x8xf32> -> vector<8x8xf32>
    %cst_31 = arith.constant dense<0xFF800000> : vector<8xf32>
    %56 = vector.multi_reduction <maximumf>, %55, %cst_31 [1] : vector<8x8xf32> to vector<8xf32>
    %57 = vector.shape_cast %56 : vector<8xf32> to vector<8x1xf32>
    %58 = vector.broadcast %57 : vector<8x1xf32> to vector<8x8xf32>
    %59 = arith.subf %55, %58 : vector<8x8xf32>
    %60 = math.exp %59 : vector<8x8xf32>
    %cst_32 = arith.constant dense<0.000000e+00> : vector<8xf32>
    %61 = vector.multi_reduction <add>, %60, %cst_32 [1] : vector<8x8xf32> to vector<8xf32>
    %62 = vector.shape_cast %61 : vector<8xf32> to vector<8x1xf32>
    %63 = tpu.reciprocal %62 {approx = true} : vector<8x1xf32> -> vector<8x1xf32>
    %64 = vector.broadcast %63 : vector<8x1xf32> to vector<8x8xf32>
    %65 = arith.mulf %60, %64 : vector<8x8xf32>
    %c2 = arith.constant 2 : index
    %c0_33 = arith.constant 0 : index
    %c0_34 = arith.constant 0 : index
    %c0_35 = arith.constant 0 : index
    %66 = vector.load %arg12[%c2, %c0_33, %c0_34, %c0_35] : memref<4x1x8x8xf32, #tpu.memory_space<vmem>>, vector<1x1x8x8xf32>
    %67 = vector.shape_cast %66 : vector<1x1x8x8xf32> to vector<8x8xf32>
    %68 = vector.shape_cast %65 : vector<8x8xf32> to vector<1x1x8x8xf32>
    tpu.vector_store %arg12[%c2, %c0_33, %c0_34, %c0_35], %68 {strides = array<i32>} : memref<4x1x8x8xf32, #tpu.memory_space<vmem>>, vector<1x1x8x8xf32>,
    %cst_36 = arith.constant dense<0.000000e+00> : vector<8x8xf32>
    %69 = tpu.matmul %65, %54, %cst_36 {dimension_numbers = #tpu.dot_dimension_numbers<[1], [0], [0], [1], [0, 0, 1, 1], [], []>} : vector<8x8xf32>, vector<8x8xf32>, vector<8x8xf32> -> vector<8x8xf32>
    %c0_37 = arith.constant 0 : index
    %c16 = arith.constant 16 : index
    %70 = vector.load %arg15[%c0_37, %c16] : memref<8x32xf32, #tpu.memory_space<vmem>>, vector<8x8xf32>
    tpu.vector_store %arg15[%c0_37, %c16], %69 {strides = array<i32>} : memref<8x32xf32, #tpu.memory_space<vmem>>, vector<8x8xf32>,
    %71 = vector.extract_strided_slice %11 {offsets = [0, 24], sizes = [8, 8], strides = [1, 1]} : vector<8x32xf32> to vector<8x8xf32>
    %72 = vector.extract_strided_slice %12 {offsets = [0, 24], sizes = [8, 8], strides = [1, 1]} : vector<8x32xf32> to vector<8x8xf32>
    %73 = vector.extract_strided_slice %13 {offsets = [0, 24], sizes = [8, 8], strides = [1, 1]} : vector<8x32xf32> to vector<8x8xf32>
    %cst_38 = arith.constant dense<0.000000e+00> : vector<8x8xf32>
    %74 = tpu.matmul %71, %72, %cst_38 {dimension_numbers = #tpu.dot_dimension_numbers<[1], [1], [0], [0], [0, 0, 1, 0], [], []>} : vector<8x8xf32>, vector<8x8xf32>, vector<8x8xf32> -> vector<8x8xf32>
    %cst_39 = arith.constant dense<0xFF800000> : vector<8xf32>
    %75 = vector.multi_reduction <maximumf>, %74, %cst_39 [1] : vector<8x8xf32> to vector<8xf32>
    %76 = vector.shape_cast %75 : vector<8xf32> to vector<8x1xf32>
    %77 = vector.broadcast %76 : vector<8x1xf32> to vector<8x8xf32>
    %78 = arith.subf %74, %77 : vector<8x8xf32>
    %79 = math.exp %78 : vector<8x8xf32>
    %cst_40 = arith.constant dense<0.000000e+00> : vector<8xf32>
    %80 = vector.multi_reduction <add>, %79, %cst_40 [1] : vector<8x8xf32> to vector<8xf32>
    %81 = vector.shape_cast %80 : vector<8xf32> to vector<8x1xf32>
    %82 = tpu.reciprocal %81 {approx = true} : vector<8x1xf32> -> vector<8x1xf32>
    %83 = vector.broadcast %82 : vector<8x1xf32> to vector<8x8xf32>
    %84 = arith.mulf %79, %83 : vector<8x8xf32>
    %c3 = arith.constant 3 : index
    %c0_41 = arith.constant 0 : index
    %c0_42 = arith.constant 0 : index
    %c0_43 = arith.constant 0 : index
    %85 = vector.load %arg12[%c3, %c0_41, %c0_42, %c0_43] : memref<4x1x8x8xf32, #tpu.memory_space<vmem>>, vector<1x1x8x8xf32>
    %86 = vector.shape_cast %85 : vector<1x1x8x8xf32> to vector<8x8xf32>
    %87 = vector.shape_cast %84 : vector<8x8xf32> to vector<1x1x8x8xf32>
    tpu.vector_store %arg12[%c3, %c0_41, %c0_42, %c0_43], %87 {strides = array<i32>} : memref<4x1x8x8xf32, #tpu.memory_space<vmem>>, vector<1x1x8x8xf32>,
    %cst_44 = arith.constant dense<0.000000e+00> : vector<8x8xf32>
    %88 = tpu.matmul %84, %73, %cst_44 {dimension_numbers = #tpu.dot_dimension_numbers<[1], [0], [0], [1], [0, 0, 1, 1], [], []>} : vector<8x8xf32>, vector<8x8xf32>, vector<8x8xf32> -> vector<8x8xf32>
    %c0_45 = arith.constant 0 : index
    %c24 = arith.constant 24 : index
    %89 = vector.load %arg15[%c0_45, %c24] : memref<8x32xf32, #tpu.memory_space<vmem>>, vector<8x8xf32>
    tpu.vector_store %arg15[%c0_45, %c24], %88 {strides = array<i32>} : memref<8x32xf32, #tpu.memory_space<vmem>>, vector<8x8xf32>,
    %c0_46 = arith.constant 0 : index
    %c0_47 = arith.constant 0 : index
    %90 = vector.load %arg15[%c0_46, %c0_47] : memref<8x32xf32, #tpu.memory_space<vmem>>, vector<8x32xf32>
    %c0_48 = arith.constant 0 : index
    %c0_49 = arith.constant 0 : index
    %c0_50 = arith.constant 0 : index
    %91 = vector.load %arg11[%c0_48, %c0_49, %c0_50] : memref<1x8x32xf32, #tpu.memory_space<vmem>>, vector<1x8x32xf32>
    %92 = vector.shape_cast %91 : vector<1x8x32xf32> to vector<8x32xf32>
    %93 = vector.shape_cast %90 : vector<8x32xf32> to vector<1x8x32xf32>
    tpu.vector_store %arg11[%c0_48, %c0_49, %c0_50], %93 {strides = array<i32>} : memref<1x8x32xf32, #tpu.memory_space<vmem>>, vector<1x8x32xf32>,
    return
  }
  func.func @transform_0(%arg0: i32, %arg1: i32) -> (i32, i32, i32) {
    %c0_i32 = arith.constant 0 : i32
    %c0_i32_0 = arith.constant 0 : i32
    return %arg0, %arg1, %c0_i32 : i32, i32, i32
  }
  func.func @transform_1(%arg0: i32, %arg1: i32) -> (i32, i32, i32) {
    %c0_i32 = arith.constant 0 : i32
    %c0_i32_0 = arith.constant 0 : i32
    %c0_i32_1 = arith.constant 0 : i32
    return %arg0, %c0_i32, %c0_i32_0 : i32, i32, i32
  }
  func.func @transform_2(%arg0: i32, %arg1: i32) -> (i32, i32, i32) {
    %c0_i32 = arith.constant 0 : i32
    %c0_i32_0 = arith.constant 0 : i32
    %c0_i32_1 = arith.constant 0 : i32
    return %arg0, %c0_i32, %c0_i32_0 : i32, i32, i32
  }
  func.func @transform_3(%arg0: i32, %arg1: i32) -> (i32, i32) {
    %c0_i32 = arith.constant 0 : i32
    %c0_i32_0 = arith.constant 0 : i32
    %c0_i32_1 = arith.constant 0 : i32
    return %c0_i32, %c0_i32_0 : i32, i32
  }
  func.func @transform_4(%arg0: i32, %arg1: i32) -> (i32, i32) {
    %c0_i32 = arith.constant 0 : i32
    %c0_i32_0 = arith.constant 0 : i32
    %c0_i32_1 = arith.constant 0 : i32
    return %c0_i32, %c0_i32_0 : i32, i32
  }
  func.func @transform_5(%arg0: i32, %arg1: i32) -> (i32, i32) {
    %c0_i32 = arith.constant 0 : i32
    %c0_i32_0 = arith.constant 0 : i32
    %c0_i32_1 = arith.constant 0 : i32
    return %c0_i32, %c0_i32_0 : i32, i32
  }
  func.func @transform_6(%arg0: i32, %arg1: i32) -> (i32, i32) {
    %c0_i32 = arith.constant 0 : i32
    %c0_i32_0 = arith.constant 0 : i32
    %c0_i32_1 = arith.constant 0 : i32
    return %c0_i32, %c0_i32_0 : i32, i32
  }
  func.func @transform_7(%arg0: i32, %arg1: i32) -> (i32, i32) {
    %c0_i32 = arith.constant 0 : i32
    %c0_i32_0 = arith.constant 0 : i32
    %c0_i32_1 = arith.constant 0 : i32
    return %c0_i32, %c0_i32_0 : i32, i32
  }
  func.func @transform_8(%arg0: i32, %arg1: i32) -> (i32, i32) {
    %c0_i32 = arith.constant 0 : i32
    %c0_i32_0 = arith.constant 0 : i32
    %c0_i32_1 = arith.constant 0 : i32
    return %c0_i32, %c0_i32_0 : i32, i32
  }
  func.func @transform_9(%arg0: i32, %arg1: i32) -> (i32, i32, i32) {
    %c0_i32 = arith.constant 0 : i32
    %c0_i32_0 = arith.constant 0 : i32
    return %arg0, %arg1, %c0_i32 : i32, i32, i32
  }
  func.func @transform_10(%arg0: i32, %arg1: i32) -> (i32, i32, i32, i32) {
    %c0_i32 = arith.constant 0 : i32
    %c0_i32_0 = arith.constant 0 : i32
    %c0_i32_1 = arith.constant 0 : i32
    return %c0_i32, %arg0, %arg1, %c0_i32_0 : i32, i32, i32, i32
  }
}

module attributes {stable_mosaic.version = 11 : i64} {
  func.func @_mha_kernel(%arg0: i32, %arg1: i32, %arg2: memref<1x8x32xf32, #tpu.memory_space<vmem>>, %arg3: memref<1x8x32xf32, #tpu.memory_space<vmem>>, %arg4: memref<1x8x32xf32, #tpu.memory_space<vmem>>, %arg5: memref<32x32xf32, #tpu.memory_space<vmem>>, %arg6: memref<32x32xf32, #tpu.memory_space<vmem>>, %arg7: memref<32x32xf32, #tpu.memory_space<vmem>>, %arg8: memref<1x32xf32, #tpu.memory_space<vmem>>, %arg9: memref<1x32xf32, #tpu.memory_space<vmem>>, %arg10: memref<1x32xf32, #tpu.memory_space<vmem>>, %arg11: memref<1x8x32xf32, #tpu.memory_space<vmem>>, %arg12: memref<4x1x8x8xf32, #tpu.memory_space<vmem>>, %arg13: memref<8x32xf32, #tpu.memory_space<vmem>>, %arg14: memref<8x32xf32, #tpu.memory_space<vmem>>, %arg15: memref<8x32xf32, #tpu.memory_space<vmem>>) attributes {dimension_semantics = [#tpu.dimension_semantics<parallel>, #tpu.dimension_semantics<arbitrary>], iteration_bounds = array<i64: 2, 1>, scalar_prefetch = 0 : i64, scratch_operands = 3 : i64, tpu.core_type = #tpu.core_type<tc>, window_params = [{transform_indices = @transform_0, window_bounds = array<i64: 1, 8, 32>}, {transform_indices = @transform_1, window_bounds = array<i64: 1, 8, 32>}, {transform_indices = @transform_2, window_bounds = array<i64: 1, 8, 32>}, {pipeline_mode = #tpu.pipeline_mode<synchronous>, transform_indices = @transform_3, window_bounds = array<i64: 32, 32>}, {pipeline_mode = #tpu.pipeline_mode<synchronous>, transform_indices = @transform_4, window_bounds = array<i64: 32, 32>}, {pipeline_mode = #tpu.pipeline_mode<synchronous>, transform_indices = @transform_5, window_bounds = array<i64: 32, 32>}, {pipeline_mode = #tpu.pipeline_mode<synchronous>, transform_indices = @transform_6, window_bounds = array<i64: 1, 32>}, {pipeline_mode = #tpu.pipeline_mode<synchronous>, transform_indices = @transform_7, window_bounds = array<i64: 1, 32>}, {pipeline_mode = #tpu.pipeline_mode<synchronous>, transform_indices = @transform_8, window_bounds = array<i64: 1, 32>}, {transform_indices = @transform_9, window_bounds = array<i64: 1, 8, 32>}, {transform_indices = @transform_10, window_bounds = array<i64: 4, 1, 8, 8>}]} {
    %c0_i32 = arith.constant 0 : i32
    %0 = arith.cmpi eq, %arg1, %c0_i32 : i32
    %1 = arith.extui %0 : i1 to i32
    %c0_i32_0 = arith.constant 0 : i32
    %2 = arith.cmpi ne, %1, %c0_i32_0 : i32
    scf.if %2 {
      %c0_51 = arith.constant 0 : index
      %c0_52 = arith.constant 0 : index
      %c0_53 = arith.constant 0 : index
      %94 = vector.load %arg3[%c0_51, %c0_52, %c0_53] : memref<1x8x32xf32, #tpu.memory_space<vmem>>, vector<1x8x32xf32>
      %95 = vector.shape_cast %94 : vector<1x8x32xf32> to vector<8x32xf32>
      %c0_54 = arith.constant 0 : index
      %c0_55 = arith.constant 0 : index
      %c0_56 = arith.constant 0 : index
      %96 = vector.load %arg4[%c0_54, %c0_55, %c0_56] : memref<1x8x32xf32, #tpu.memory_space<vmem>>, vector<1x8x32xf32>
      %97 = vector.shape_cast %96 : vector<1x8x32xf32> to vector<8x32xf32>
      %c0_57 = arith.constant 0 : index
      %c0_58 = arith.constant 0 : index
      %98 = vector.load %arg6[%c0_57, %c0_58] : memref<32x32xf32, #tpu.memory_space<vmem>>, vector<32x32xf32>
      %cst_59 = arith.constant dense<0.000000e+00> : vector<8x32xf32>
      %99 = tpu.matmul %95, %98, %cst_59 {dimension_numbers = #tpu.dot_dimension_numbers<[1], [0], [0], [1], [0, 0, 1, 1], [], []>} : vector<8x32xf32>, vector<32x32xf32>, vector<8x32xf32> -> vector<8x32xf32>
      %c0_60 = arith.constant 0 : index
      %c0_61 = arith.constant 0 : index
      %100 = vector.load %arg9[%c0_60, %c0_61] : memref<1x32xf32, #tpu.memory_space<vmem>>, vector<1x32xf32>
      %101 = vector.broadcast %100 : vector<1x32xf32> to vector<8x32xf32>
      %102 = arith.addf %99, %101 : vector<8x32xf32>
      %c0_62 = arith.constant 0 : index
      %c0_63 = arith.constant 0 : index
      %103 = vector.load %arg13[%c0_62, %c0_63] : memref<8x32xf32, #tpu.memory_space<vmem>>, vector<8x32xf32>
      tpu.vector_store %arg13[%c0_62, %c0_63], %102 {strides = array<i32>} : memref<8x32xf32, #tpu.memory_space<vmem>>, vector<8x32xf32>,
      %c0_64 = arith.constant 0 : index
      %c0_65 = arith.constant 0 : index
      %104 = vector.load %arg7[%c0_64, %c0_65] : memref<32x32xf32, #tpu.memory_space<vmem>>, vector<32x32xf32>
      %cst_66 = arith.constant dense<0.000000e+00> : vector<8x32xf32>
      %105 = tpu.matmul %97, %104, %cst_66 {dimension_numbers = #tpu.dot_dimension_numbers<[1], [0], [0], [1], [0, 0, 1, 1], [], []>} : vector<8x32xf32>, vector<32x32xf32>, vector<8x32xf32> -> vector<8x32xf32>
      %c0_67 = arith.constant 0 : index
      %c0_68 = arith.constant 0 : index
      %106 = vector.load %arg10[%c0_67, %c0_68] : memref<1x32xf32, #tpu.memory_space<vmem>>, vector<1x32xf32>
      %107 = vector.broadcast %106 : vector<1x32xf32> to vector<8x32xf32>
      %108 = arith.addf %105, %107 : vector<8x32xf32>
      %c0_69 = arith.constant 0 : index
      %c0_70 = arith.constant 0 : index
      %109 = vector.load %arg14[%c0_69, %c0_70] : memref<8x32xf32, #tpu.memory_space<vmem>>, vector<8x32xf32>
      tpu.vector_store %arg14[%c0_69, %c0_70], %108 {strides = array<i32>} : memref<8x32xf32, #tpu.memory_space<vmem>>, vector<8x32xf32>,
    } else {
    }
    %c0 = arith.constant 0 : index
    %c0_1 = arith.constant 0 : index
    %c0_2 = arith.constant 0 : index
    %3 = vector.load %arg2[%c0, %c0_1, %c0_2] : memref<1x8x32xf32, #tpu.memory_space<vmem>>, vector<1x8x32xf32>
    %4 = vector.shape_cast %3 : vector<1x8x32xf32> to vector<8x32xf32>
    %c0_3 = arith.constant 0 : index
    %c0_4 = arith.constant 0 : index
    %5 = vector.load %arg5[%c0_3, %c0_4] : memref<32x32xf32, #tpu.memory_space<vmem>>, vector<32x32xf32>
    %cst = arith.constant dense<0.000000e+00> : vector<8x32xf32>
    %6 = tpu.matmul %4, %5, %cst {dimension_numbers = #tpu.dot_dimension_numbers<[1], [0], [0], [1], [0, 0, 1, 1], [], []>} : vector<8x32xf32>, vector<32x32xf32>, vector<8x32xf32> -> vector<8x32xf32>
    %c0_5 = arith.constant 0 : index
    %c0_6 = arith.constant 0 : index
    %7 = vector.load %arg8[%c0_5, %c0_6] : memref<1x32xf32, #tpu.memory_space<vmem>>, vector<1x32xf32>
    %8 = vector.broadcast %7 : vector<1x32xf32> to vector<8x32xf32>
    %9 = arith.addf %6, %8 : vector<8x32xf32>
    %cst_7 = arith.constant 0.353553385 : f32
    %10 = vector.broadcast %cst_7 : f32 to vector<8x32xf32>
    %11 = arith.mulf %9, %10 : vector<8x32xf32>
    %c0_8 = arith.constant 0 : index
    %c0_9 = arith.constant 0 : index
    %12 = vector.load %arg13[%c0_8, %c0_9] : memref<8x32xf32, #tpu.memory_space<vmem>>, vector<8x32xf32>
    %c0_10 = arith.constant 0 : index
    %c0_11 = arith.constant 0 : index
    %13 = vector.load %arg14[%c0_10, %c0_11] : memref<8x32xf32, #tpu.memory_space<vmem>>, vector<8x32xf32>
    %14 = vector.extract_strided_slice %11 {offsets = [0, 0], sizes = [8, 8], strides = [1, 1]} : vector<8x32xf32> to vector<8x8xf32>
    %15 = vector.extract_strided_slice %12 {offsets = [0, 0], sizes = [8, 8], strides = [1, 1]} : vector<8x32xf32> to vector<8x8xf32>
    %16 = vector.extract_strided_slice %13 {offsets = [0, 0], sizes = [8, 8], strides = [1, 1]} : vector<8x32xf32> to vector<8x8xf32>
    %cst_12 = arith.constant dense<0.000000e+00> : vector<8x8xf32>
    %17 = tpu.matmul %14, %15, %cst_12 {dimension_numbers = #tpu.dot_dimension_numbers<[1], [1], [0], [0], [0, 0, 1, 0], [], []>} : vector<8x8xf32>, vector<8x8xf32>, vector<8x8xf32> -> vector<8x8xf32>
    %cst_13 = arith.constant dense<0xFF800000> : vector<8xf32>
    %18 = vector.multi_reduction <maximumf>, %17, %cst_13 [1] : vector<8x8xf32> to vector<8xf32>
    %19 = vector.shape_cast %18 : vector<8xf32> to vector<8x1xf32>
    %20 = vector.broadcast %19 : vector<8x1xf32> to vector<8x8xf32>
    %21 = arith.subf %17, %20 : vector<8x8xf32>
    %22 = math.exp %21 : vector<8x8xf32>
    %cst_14 = arith.constant dense<0.000000e+00> : vector<8xf32>
    %23 = vector.multi_reduction <add>, %22, %cst_14 [1] : vector<8x8xf32> to vector<8xf32>
    %24 = vector.shape_cast %23 : vector<8xf32> to vector<8x1xf32>
    %25 = tpu.reciprocal %24 {approx = true} : vector<8x1xf32> -> vector<8x1xf32>
    %26 = vector.broadcast %25 : vector<8x1xf32> to vector<8x8xf32>
    %27 = arith.mulf %22, %26 : vector<8x8xf32>
    %c0_15 = arith.constant 0 : index
    %c0_16 = arith.constant 0 : index
    %c0_17 = arith.constant 0 : index
    %c0_18 = arith.constant 0 : index
    %28 = vector.load %arg12[%c0_15, %c0_16, %c0_17, %c0_18] : memref<4x1x8x8xf32, #tpu.memory_space<vmem>>, vector<1x1x8x8xf32>
    %29 = vector.shape_cast %28 : vector<1x1x8x8xf32> to vector<8x8xf32>
    %30 = vector.shape_cast %27 : vector<8x8xf32> to vector<1x1x8x8xf32>
    tpu.vector_store %arg12[%c0_15, %c0_16, %c0_17, %c0_18], %30 {strides = array<i32>} : memref<4x1x8x8xf32, #tpu.memory_space<vmem>>, vector<1x1x8x8xf32>,
    %cst_19 = arith.constant dense<0.000000e+00> : vector<8x8xf32>
    %31 = tpu.matmul %27, %16, %cst_19 {dimension_numbers = #tpu.dot_dimension_numbers<[1], [0], [0], [1], [0, 0, 1, 1], [], []>} : vector<8x8xf32>, vector<8x8xf32>, vector<8x8xf32> -> vector<8x8xf32>
    %c0_20 = arith.constant 0 : index
    %c0_21 = arith.constant 0 : index
    %32 = vector.load %arg15[%c0_20, %c0_21] : memref<8x32xf32, #tpu.memory_space<vmem>>, vector<8x8xf32>
    tpu.vector_store %arg15[%c0_20, %c0_21], %31 {strides = array<i32>} : memref<8x32xf32, #tpu.memory_space<vmem>>, vector<8x8xf32>,
    %33 = vector.extract_strided_slice %11 {offsets = [0, 8], sizes = [8, 8], strides = [1, 1]} : vector<8x32xf32> to vector<8x8xf32>
    %34 = vector.extract_strided_slice %12 {offsets = [0, 8], sizes = [8, 8], strides = [1, 1]} : vector<8x32xf32> to vector<8x8xf32>
    %35 = vector.extract_strided_slice %13 {offsets = [0, 8], sizes = [8, 8], strides = [1, 1]} : vector<8x32xf32> to vector<8x8xf32>
    %cst_22 = arith.constant dense<0.000000e+00> : vector<8x8xf32>
    %36 = tpu.matmul %33, %34, %cst_22 {dimension_numbers = #tpu.dot_dimension_numbers<[1], [1], [0], [0], [0, 0, 1, 0], [], []>} : vector<8x8xf32>, vector<8x8xf32>, vector<8x8xf32> -> vector<8x8xf32>
    %cst_23 = arith.constant dense<0xFF800000> : vector<8xf32>
    %37 = vector.multi_reduction <maximumf>, %36, %cst_23 [1] : vector<8x8xf32> to vector<8xf32>
    %38 = vector.shape_cast %37 : vector<8xf32> to vector<8x1xf32>
    %39 = vector.broadcast %38 : vector<8x1xf32> to vector<8x8xf32>
    %40 = arith.subf %36, %39 : vector<8x8xf32>
    %41 = math.exp %40 : vector<8x8xf32>
    %cst_24 = arith.constant dense<0.000000e+00> : vector<8xf32>
    %42 = vector.multi_reduction <add>, %41, %cst_24 [1] : vector<8x8xf32> to vector<8xf32>
    %43 = vector.shape_cast %42 : vector<8xf32> to vector<8x1xf32>
    %44 = tpu.reciprocal %43 {approx = true} : vector<8x1xf32> -> vector<8x1xf32>
    %45 = vector.broadcast %44 : vector<8x1xf32> to vector<8x8xf32>
    %46 = arith.mulf %41, %45 : vector<8x8xf32>
    %c1 = arith.constant 1 : index
    %c0_25 = arith.constant 0 : index
    %c0_26 = arith.constant 0 : index
    %c0_27 = arith.constant 0 : index
    %47 = vector.load %arg12[%c1, %c0_25, %c0_26, %c0_27] : memref<4x1x8x8xf32, #tpu.memory_space<vmem>>, vector<1x1x8x8xf32>
    %48 = vector.shape_cast %47 : vector<1x1x8x8xf32> to vector<8x8xf32>
    %49 = vector.shape_cast %46 : vector<8x8xf32> to vector<1x1x8x8xf32>
    tpu.vector_store %arg12[%c1, %c0_25, %c0_26, %c0_27], %49 {strides = array<i32>} : memref<4x1x8x8xf32, #tpu.memory_space<vmem>>, vector<1x1x8x8xf32>,
    %cst_28 = arith.constant dense<0.000000e+00> : vector<8x8xf32>
    %50 = tpu.matmul %46, %35, %cst_28 {dimension_numbers = #tpu.dot_dimension_numbers<[1], [0], [0], [1], [0, 0, 1, 1], [], []>} : vector<8x8xf32>, vector<8x8xf32>, vector<8x8xf32> -> vector<8x8xf32>
    %c0_29 = arith.constant 0 : index
    %c8 = arith.constant 8 : index
    %51 = vector.load %arg15[%c0_29, %c8] : memref<8x32xf32, #tpu.memory_space<vmem>>, vector<8x8xf32>
    tpu.vector_store %arg15[%c0_29, %c8], %50 {strides = array<i32>} : memref<8x32xf32, #tpu.memory_space<vmem>>, vector<8x8xf32>,
    %52 = vector.extract_strided_slice %11 {offsets = [0, 16], sizes = [8, 8], strides = [1, 1]} : vector<8x32xf32> to vector<8x8xf32>
    %53 = vector.extract_strided_slice %12 {offsets = [0, 16], sizes = [8, 8], strides = [1, 1]} : vector<8x32xf32> to vector<8x8xf32>
    %54 = vector.extract_strided_slice %13 {offsets = [0, 16], sizes = [8, 8], strides = [1, 1]} : vector<8x32xf32> to vector<8x8xf32>
    %cst_30 = arith.constant dense<0.000000e+00> : vector<8x8xf32>
    %55 = tpu.matmul %52, %53, %cst_30 {dimension_numbers = #tpu.dot_dimension_numbers<[1], [1], [0], [0], [0, 0, 1, 0], [], []>} : vector<8x8xf32>, vector<8x8xf32>, vector<8x8xf32> -> vector<8x8xf32>
    %cst_31 = arith.constant dense<0xFF800000> : vector<8xf32>
    %56 = vector.multi_reduction <maximumf>, %55, %cst_31 [1] : vector<8x8xf32> to vector<8xf32>
    %57 = vector.shape_cast %56 : vector<8xf32> to vector<8x1xf32>
    %58 = vector.broadcast %57 : vector<8x1xf32> to vector<8x8xf32>
    %59 = arith.subf %55, %58 : vector<8x8xf32>
    %60 = math.exp %59 : vector<8x8xf32>
    %cst_32 = arith.constant dense<0.000000e+00> : vector<8xf32>
    %61 = vector.multi_reduction <add>, %60, %cst_32 [1] : vector<8x8xf32> to vector<8xf32>
    %62 = vector.shape_cast %61 : vector<8xf32> to vector<8x1xf32>
    %63 = tpu.reciprocal %62 {approx = true} : vector<8x1xf32> -> vector<8x1xf32>
    %64 = vector.broadcast %63 : vector<8x1xf32> to vector<8x8xf32>
    %65 = arith.mulf %60, %64 : vector<8x8xf32>
    %c2 = arith.constant 2 : index
    %c0_33 = arith.constant 0 : index
    %c0_34 = arith.constant 0 : index
    %c0_35 = arith.constant 0 : index
    %66 = vector.load %arg12[%c2, %c0_33, %c0_34, %c0_35] : memref<4x1x8x8xf32, #tpu.memory_space<vmem>>, vector<1x1x8x8xf32>
    %67 = vector.shape_cast %66 : vector<1x1x8x8xf32> to vector<8x8xf32>
    %68 = vector.shape_cast %65 : vector<8x8xf32> to vector<1x1x8x8xf32>
    tpu.vector_store %arg12[%c2, %c0_33, %c0_34, %c0_35], %68 {strides = array<i32>} : memref<4x1x8x8xf32, #tpu.memory_space<vmem>>, vector<1x1x8x8xf32>,
    %cst_36 = arith.constant dense<0.000000e+00> : vector<8x8xf32>
    %69 = tpu.matmul %65, %54, %cst_36 {dimension_numbers = #tpu.dot_dimension_numbers<[1], [0], [0], [1], [0, 0, 1, 1], [], []>} : vector<8x8xf32>, vector<8x8xf32>, vector<8x8xf32> -> vector<8x8xf32>
    %c0_37 = arith.constant 0 : index
    %c16 = arith.constant 16 : index
    %70 = vector.load %arg15[%c0_37, %c16] : memref<8x32xf32, #tpu.memory_space<vmem>>, vector<8x8xf32>
    tpu.vector_store %arg15[%c0_37, %c16], %69 {strides = array<i32>} : memref<8x32xf32, #tpu.memory_space<vmem>>, vector<8x8xf32>,
    %71 = vector.extract_strided_slice %11 {offsets = [0, 24], sizes = [8, 8], strides = [1, 1]} : vector<8x32xf32> to vector<8x8xf32>
    %72 = vector.extract_strided_slice %12 {offsets = [0, 24], sizes = [8, 8], strides = [1, 1]} : vector<8x32xf32> to vector<8x8xf32>
    %73 = vector.extract_strided_slice %13 {offsets = [0, 24], sizes = [8, 8], strides = [1, 1]} : vector<8x32xf32> to vector<8x8xf32>
    %cst_38 = arith.constant dense<0.000000e+00> : vector<8x8xf32>
    %74 = tpu.matmul %71, %72, %cst_38 {dimension_numbers = #tpu.dot_dimension_numbers<[1], [1], [0], [0], [0, 0, 1, 0], [], []>} : vector<8x8xf32>, vector<8x8xf32>, vector<8x8xf32> -> vector<8x8xf32>
    %cst_39 = arith.constant dense<0xFF800000> : vector<8xf32>
    %75 = vector.multi_reduction <maximumf>, %74, %cst_39 [1] : vector<8x8xf32> to vector<8xf32>
    %76 = vector.shape_cast %75 : vector<8xf32> to vector<8x1xf32>
    %77 = vector.broadcast %76 : vector<8x1xf32> to vector<8x8xf32>
    %78 = arith.subf %74, %77 : vector<8x8xf32>
    %79 = math.exp %78 : vector<8x8xf32>
    %cst_40 = arith.constant dense<0.000000e+00> : vector<8xf32>
    %80 = vector.multi_reduction <add>, %79, %cst_40 [1] : vector<8x8xf32> to vector<8xf32>
    %81 = vector.shape_cast %80 : vector<8xf32> to vector<8x1xf32>
    %82 = tpu.reciprocal %81 {approx = true} : vector<8x1xf32> -> vector<8x1xf32>
    %83 = vector.broadcast %82 : vector<8x1xf32> to vector<8x8xf32>
    %84 = arith.mulf %79, %83 : vector<8x8xf32>
    %c3 = arith.constant 3 : index
    %c0_41 = arith.constant 0 : index
    %c0_42 = arith.constant 0 : index
    %c0_43 = arith.constant 0 : index
    %85 = vector.load %arg12[%c3, %c0_41, %c0_42, %c0_43] : memref<4x1x8x8xf32, #tpu.memory_space<vmem>>, vector<1x1x8x8xf32>
    %86 = vector.shape_cast %85 : vector<1x1x8x8xf32> to vector<8x8xf32>
    %87 = vector.shape_cast %84 : vector<8x8xf32> to vector<1x1x8x8xf32>
    tpu.vector_store %arg12[%c3, %c0_41, %c0_42, %c0_43], %87 {strides = array<i32>} : memref<4x1x8x8xf32, #tpu.memory_space<vmem>>, vector<1x1x8x8xf32>,
    %cst_44 = arith.constant dense<0.000000e+00> : vector<8x8xf32>
    %88 = tpu.matmul %84, %73, %cst_44 {dimension_numbers = #tpu.dot_dimension_numbers<[1], [0], [0], [1], [0, 0, 1, 1], [], []>} : vector<8x8xf32>, vector<8x8xf32>, vector<8x8xf32> -> vector<8x8xf32>
    %c0_45 = arith.constant 0 : index
    %c24 = arith.constant 24 : index
    %89 = vector.load %arg15[%c0_45, %c24] : memref<8x32xf32, #tpu.memory_space<vmem>>, vector<8x8xf32>
    tpu.vector_store %arg15[%c0_45, %c24], %88 {strides = array<i32>} : memref<8x32xf32, #tpu.memory_space<vmem>>, vector<8x8xf32>,
    %c0_46 = arith.constant 0 : index
    %c0_47 = arith.constant 0 : index
    %90 = vector.load %arg15[%c0_46, %c0_47] : memref<8x32xf32, #tpu.memory_space<vmem>>, vector<8x32xf32>
    %c0_48 = arith.constant 0 : index
    %c0_49 = arith.constant 0 : index
    %c0_50 = arith.constant 0 : index
    %91 = vector.load %arg11[%c0_48, %c0_49, %c0_50] : memref<1x8x32xf32, #tpu.memory_space<vmem>>, vector<1x8x32xf32>
    %92 = vector.shape_cast %91 : vector<1x8x32xf32> to vector<8x32xf32>
    %93 = vector.shape_cast %90 : vector<8x32xf32> to vector<1x8x32xf32>
    tpu.vector_store %arg11[%c0_48, %c0_49, %c0_50], %93 {strides = array<i32>} : memref<1x8x32xf32, #tpu.memory_space<vmem>>, vector<1x8x32xf32>,
    return
  }
  func.func @transform_0(%arg0: i32, %arg1: i32) -> (i32, i32, i32) {
    %c0_i32 = arith.constant 0 : i32
    %c0_i32_0 = arith.constant 0 : i32
    return %arg0, %arg1, %c0_i32 : i32, i32, i32
  }
  func.func @transform_1(%arg0: i32, %arg1: i32) -> (i32, i32, i32) {
    %c0_i32 = arith.constant 0 : i32
    %c0_i32_0 = arith.constant 0 : i32
    %c0_i32_1 = arith.constant 0 : i32
    return %arg0, %c0_i32, %c0_i32_0 : i32, i32, i32
  }
  func.func @transform_2(%arg0: i32, %arg1: i32) -> (i32, i32, i32) {
    %c0_i32 = arith.constant 0 : i32
    %c0_i32_0 = arith.constant 0 : i32
    %c0_i32_1 = arith.constant 0 : i32
    return %arg0, %c0_i32, %c0_i32_0 : i32, i32, i32
  }
  func.func @transform_3(%arg0: i32, %arg1: i32) -> (i32, i32) {
    %c0_i32 = arith.constant 0 : i32
    %c0_i32_0 = arith.constant 0 : i32
    %c0_i32_1 = arith.constant 0 : i32
    return %c0_i32, %c0_i32_0 : i32, i32
  }
  func.func @transform_4(%arg0: i32, %arg1: i32) -> (i32, i32) {
    %c0_i32 = arith.constant 0 : i32
    %c0_i32_0 = arith.constant 0 : i32
    %c0_i32_1 = arith.constant 0 : i32
    return %c0_i32, %c0_i32_0 : i32, i32
  }
  func.func @transform_5(%arg0: i32, %arg1: i32) -> (i32, i32) {
    %c0_i32 = arith.constant 0 : i32
    %c0_i32_0 = arith.constant 0 : i32
    %c0_i32_1 = arith.constant 0 : i32
    return %c0_i32, %c0_i32_0 : i32, i32
  }
  func.func @transform_6(%arg0: i32, %arg1: i32) -> (i32, i32) {
    %c0_i32 = arith.constant 0 : i32
    %c0_i32_0 = arith.constant 0 : i32
    %c0_i32_1 = arith.constant 0 : i32
    return %c0_i32, %c0_i32_0 : i32, i32
  }
  func.func @transform_7(%arg0: i32, %arg1: i32) -> (i32, i32) {
    %c0_i32 = arith.constant 0 : i32
    %c0_i32_0 = arith.constant 0 : i32
    %c0_i32_1 = arith.constant 0 : i32
    return %c0_i32, %c0_i32_0 : i32, i32
  }
  func.func @transform_8(%arg0: i32, %arg1: i32) -> (i32, i32) {
    %c0_i32 = arith.constant 0 : i32
    %c0_i32_0 = arith.constant 0 : i32
    %c0_i32_1 = arith.constant 0 : i32
    return %c0_i32, %c0_i32_0 : i32, i32
  }
  func.func @transform_9(%arg0: i32, %arg1: i32) -> (i32, i32, i32) {
    %c0_i32 = arith.constant 0 : i32
    %c0_i32_0 = arith.constant 0 : i32
    return %arg0, %arg1, %c0_i32 : i32, i32, i32
  }
  func.func @transform_10(%arg0: i32, %arg1: i32) -> (i32, i32, i32, i32) {
    %c0_i32 = arith.constant 0 : i32
    %c0_i32_0 = arith.constant 0 : i32
    %c0_i32_1 = arith.constant 0 : i32
    return %c0_i32, %arg0, %arg1, %c0_i32_0 : i32, i32, i32, i32
  }
}

</mosaic_0001>

<llo_original>
// kernel: tpu_custom_call.1
$region0: #{tpu_custom_call.1}
  #allocation0 [shape = 'u32[]', space=smem, size = 0x4, offset = 0x4, fixed_abs, tag = 'smem constant byte address 0x4 - core index']
  #allocation1 [shape = 'u32[72,128]{1,0:T(1,128)}', space=vmem, size = 0x9000, scoped, tag = 'internal scratch']
  #allocation2 [shape = 'f32[8,32]{1,0:T(8,128)}', space=vmem, size = 0x1000, scoped, tag = 'scratch operand']
  #allocation3 [shape = 'f32[8,32]{1,0:T(8,128)}', space=vmem, size = 0x1000, scoped, tag = 'scratch operand']
  #allocation4 [shape = 'f32[8,32]{1,0:T(8,128)}', space=vmem, size = 0x1000, scoped, tag = 'scratch operand']
  %s0 = inlined_call_operand.hbm [shape: f32[2,8,32], index: 0, kind: input, shape index: {}]
  %s1 = inlined_call_operand.hbm [shape: f32[2,8,32], index: 1, kind: input, shape index: {}]
  %s2 = inlined_call_operand.hbm [shape: f32[2,8,32], index: 2, kind: input, shape index: {}]
  %s3 = inlined_call_operand.hbm [shape: f32[32,32], index: 3, kind: input, shape index: {}]
  %s4 = inlined_call_operand.hbm [shape: f32[32,32], index: 4, kind: input, shape index: {}]
  %s5 = inlined_call_operand.hbm [shape: f32[32,32], index: 5, kind: input, shape index: {}]
  %s6 = inlined_call_operand.vmem [shape: f32[1,32], index: 6, kind: input, shape index: {}]
  %s7 = inlined_call_operand.vmem [shape: f32[1,32], index: 7, kind: input, shape index: {}]
  %s8 = inlined_call_operand.vmem [shape: f32[1,32], index: 8, kind: input, shape index: {}]
  %s9 = inlined_call_operand.hbm [shape: f32[2,8,32], index: 9, kind: output, shape index: {0}]
  %s10 = inlined_call_operand.hbm [shape: f32[4,2,8,8], index: 10, kind: output, shape index: {1}]
  %11 = xla_tuple %s9, %s10
  %s12 = sld [smem:[#allocation0]]
  $region105: #{tpu_custom_call.1} parent=0
    _
  %s14 = ssub.s32 1, %s12
  %s15 = scalar_select 0, %s14, %s12
  $region1: #{tpu_custom_call.1} parent=0
    #allocation5 [shape = 'u8[8192]{0}', space=vmem, size = 0x2000, scoped, tag = 'input window, operand 0']
    #allocation6 [shape = 's32[2]{0}', space=sflag, size = 0x8, scoped, tag = 'scoped memory for tpu_custom_call.1']
    #allocation7 [shape = 's32[2]{0}', space=sflag, size = 0x8, scoped, tag = 'scoped memory for tpu_custom_call.1']
    #allocation8 [shape = 'u8[8192]{0}', space=vmem, size = 0x2000, scoped, tag = 'input window, operand 1']
    #allocation9 [shape = 's32[2]{0}', space=sflag, size = 0x8, scoped, tag = 'scoped memory for tpu_custom_call.1']
    #allocation10 [shape = 'u8[8192]{0}', space=vmem, size = 0x2000, scoped, tag = 'input window, operand 2']
    #allocation11 [shape = 'u8[16384]{0}', space=vmem, size = 0x4000, scoped, tag = 'input window, operand 3, single buffered']
    #allocation12 [shape = 's32[1]{0}', space=sflag, size = 0x4, scoped, tag = 'scoped memory for tpu_custom_call.1']
    #allocation13 [shape = 'u8[16384]{0}', space=vmem, size = 0x4000, scoped, tag = 'input window, operand 4, single buffered']
    #allocation14 [shape = 'u8[16384]{0}', space=vmem, size = 0x4000, scoped, tag = 'input window, operand 5, single buffered']
    #allocation15 [shape = 's32[1]{0}', space=sflag, size = 0x4, scoped, tag = 'scoped memory for tpu_custom_call.1']
    #allocation16 [shape = 'u8[8192]{0}', space=vmem, size = 0x2000, scoped, tag = 'output window, operand 0']
    #allocation17 [shape = 'u8[32768]{0}', space=vmem, size = 0x8000, scoped, tag = 'output window, operand 1']
    #allocation18 [shape = 's32[2]{0}', space=sflag, size = 0x8, scoped, tag = 'scoped memory for tpu_custom_call.1']
    %16 = vsyncpa [#allocation6], 0
    %s17 = scalar_lea.sflag [#allocation6], 1
    %18 = vsyncpa %s17, 0
    %19 = vsyncpa [#allocation9], 0
    %s20 = scalar_lea.sflag [#allocation9], 1
    %21 = vsyncpa %s20, 0
    %22 = vsyncpa [#allocation12], 0
    %23 = vsyncpa [#allocation15], 0
    %24 = vsyncpa [#allocation7], 0
    %s25 = scalar_lea.sflag [#allocation7], 1
    %26 = vsyncpa %s25, 0
    %27 = vsyncpa [#allocation18], 0
    %s28 = scalar_lea.sflag [#allocation18], 1
    %29 = vsyncpa %s28, 0
    loop: start=0, step=1, limit=4
    $region2: #{tpu_custom_call.1} parent=1 // loop_pre_header
      _
    $region3: #{tpu_custom_call.1} parent=1 // loop_header
      %s31 = sphi 0, %s35
      %p32 = scmp.ge.s32.totalorder %s31, 4
      %s38 = sphi 0, %s50
      %s39 = sphi 0, %s46
      %s40 = sphi 0, %s38
      %s41 = sphi 0, %s39
      %s42 = sphi 0, %s40
      %s43 = sphi 0, %s41
      %s55 = sphi 0, %s57
      %s58 = sphi 0, %s55
      %s59 = sphi 0, %s58
      %s75 = sphi 0, %s59
      %s81 = sphi 0, %s83
      %s84 = sphi 0, %s81
      %s85 = sphi 0, %s84
      %s101 = sphi 0, %s85
      %s107 = sphi 0, %s109
      %s110 = sphi 0, %s107
      %s111 = sphi 0, %s110
      %s127 = sphi 0, %s111
      %s131 = sphi 0, %s131
      %s133 = sphi 0, %s131
      %s134 = sphi 0, %s133
      %s148 = sphi 0, %s134
      %s152 = sphi 0, %s152
      %s154 = sphi 0, %s152
      %s155 = sphi 0, %s154
      %s169 = sphi 0, %s155
      %s173 = sphi 0, %s173
      %s175 = sphi 0, %s173
      %s176 = sphi 0, %s175
      %s190 = sphi 0, %s176
      %s194 = sphi 0, %s194
      %s196 = sphi 0, %s194
      %s197 = sphi 0, %s196
      %s211 = sphi 0, %s197
      %s215 = sphi 0, %s215
      %s217 = sphi 0, %s215
      %s218 = sphi 0, %s217
      %s232 = sphi 0, %s218
      %s236 = sphi 0, %s236
      %s238 = sphi 0, %s236
      %s239 = sphi 0, %s238
      %s253 = sphi 0, %s239
      %s261 = sphi 0, %s263
      %s264 = sphi 0, %s261
      %s265 = sphi 0, %s264
      %s281 = sphi 0, %s265
      %s289 = sphi 0, %s291
      %s292 = sphi 0, %s289
      %s293 = sphi 0, %s292
      %s309 = sphi 0, %s293
    $region4: #{tpu_custom_call.1} parent=1 // loop_header_branch
      %34 = sbr.rel (%p32) target = $region8
    $region5: #{tpu_custom_call.1} parent=1 // loop_body
      %s36 = ssub.s32 %s31, 1
      %s37 = ssub.s32 %s31, 2
      %s44 = sadd.s32 1, %s39
      %p45 = scmp.ge.s32.totalorder %s44, 1
      %s46 = scalar_select %p45, 0, %s44
      %s47 = sadd.s32 1, %s38
      %s48 = scalar_select %p45, %s47, %s38
      %p49 = scmp.ge.s32.totalorder %s48, 2
      %s50 = scalar_select %p49, 0, %s48
      %s51 = ssub.s32 %s38, %s50
      %s52 = ssub.s32 %s39, %s46
      %s53 = sor.u32 %s51, %s52
      %p54 = scmp.eq.s32.totalorder %s53, 0
      %s56 = sadd.s32 %s55, 1
      %s57 = scalar_select %p54, %s55, %s56
      %p60 = pneg %p54
      %p61 = scmp.eq.s32.totalorder %s31, 1
      %p62 = por %p60, %p61
      %p63 = scmp.ne.s32.totalorder %s55, %s58
      %p64 = scmp.eq.s32.totalorder %s31, 0
      %p65 = por %p63, %p64
      %p66 = scmp.ne.s32.totalorder %s55, %s58
      %p67 = scmp.eq.s32.totalorder %s36, 1
      %p68 = por %p66, %p67
      %p69 = scmp.ne.s32.totalorder %s58, %s59
      %p70 = scmp.eq.s32.totalorder %s36, 0
      %p71 = por %p69, %p70
      %p72 = scmp.ne.s32.totalorder %s58, %s59
      %p73 = scmp.eq.s32.totalorder %s37, 1
      %p74 = por %p72, %p73
      %p76 = scmp.ne.s32.totalorder %s59, %s75
      %p77 = scmp.eq.s32.totalorder %s37, 0
      %p78 = por %p76, %p77
      %s79 = ssub.s32 %s38, %s50
      %p80 = scmp.eq.s32.totalorder %s79, 0
      %s82 = sadd.s32 %s81, 1
      %s83 = scalar_select %p80, %s81, %s82
      %p86 = pneg %p80
      %p87 = scmp.eq.s32.totalorder %s31, 1
      %p88 = por %p86, %p87
      %p89 = scmp.ne.s32.totalorder %s81, %s84
      %p90 = scmp.eq.s32.totalorder %s31, 0
      %p91 = por %p89, %p90
      %p92 = scmp.ne.s32.totalorder %s81, %s84
      %p93 = scmp.eq.s32.totalorder %s36, 1
      %p94 = por %p92, %p93
      %p95 = scmp.ne.s32.totalorder %s84, %s85
      %p96 = scmp.eq.s32.totalorder %s36, 0
      %p97 = por %p95, %p96
      %p98 = scmp.ne.s32.totalorder %s84, %s85
      %p99 = scmp.eq.s32.totalorder %s37, 1
      %p100 = por %p98, %p99
      %p102 = scmp.ne.s32.totalorder %s85, %s101
      %p103 = scmp.eq.s32.totalorder %s37, 0
      %p104 = por %p102, %p103
      %s105 = ssub.s32 %s38, %s50
      %p106 = scmp.eq.s32.totalorder %s105, 0
      %s108 = sadd.s32 %s107, 1
      %s109 = scalar_select %p106, %s107, %s108
      %p112 = pneg %p106
      %p113 = scmp.eq.s32.totalorder %s31, 1
      %p114 = por %p112, %p113
      %p115 = scmp.ne.s32.totalorder %s107, %s110
      %p116 = scmp.eq.s32.totalorder %s31, 0
      %p117 = por %p115, %p116
      %p118 = scmp.ne.s32.totalorder %s107, %s110
      %p119 = scmp.eq.s32.totalorder %s36, 1
      %p120 = por %p118, %p119
      %p121 = scmp.ne.s32.totalorder %s110, %s111
      %p122 = scmp.eq.s32.totalorder %s36, 0
      %p123 = por %p121, %p122
      %p124 = scmp.ne.s32.totalorder %s110, %s111
      %p125 = scmp.eq.s32.totalorder %s37, 1
      %p126 = por %p124, %p125
      %p128 = scmp.ne.s32.totalorder %s111, %s127
      %p129 = scmp.eq.s32.totalorder %s37, 0
      %p130 = por %p128, %p129
      %s132 = sadd.s32 %s131, 1
      %p135 = scmp.eq.s32.totalorder %s31, 1
      %p136 = scmp.ne.s32.totalorder %s131, %s133
      %p137 = scmp.eq.s32.totalorder %s31, 0
      %p138 = por %p136, %p137
      %p139 = scmp.ne.s32.totalorder %s131, %s133
      %p140 = scmp.eq.s32.totalorder %s36, 1
      %p141 = por %p139, %p140
      %p142 = scmp.ne.s32.totalorder %s133, %s134
      %p143 = scmp.eq.s32.totalorder %s36, 0
      %p144 = por %p142, %p143
      %p145 = scmp.ne.s32.totalorder %s133, %s134
      %p146 = scmp.eq.s32.totalorder %s37, 1
      %p147 = por %p145, %p146
      %p149 = scmp.ne.s32.totalorder %s134, %s148
      %p150 = scmp.eq.s32.totalorder %s37, 0
      %p151 = por %p149, %p150
      %s153 = sadd.s32 %s152, 1
      %p156 = scmp.eq.s32.totalorder %s31, 1
      %p157 = scmp.ne.s32.totalorder %s152, %s154
      %p158 = scmp.eq.s32.totalorder %s31, 0
      %p159 = por %p157, %p158
      %p160 = scmp.ne.s32.totalorder %s152, %s154
      %p161 = scmp.eq.s32.totalorder %s36, 1
      %p162 = por %p160, %p161
      %p163 = scmp.ne.s32.totalorder %s154, %s155
      %p164 = scmp.eq.s32.totalorder %s36, 0
      %p165 = por %p163, %p164
      %p166 = scmp.ne.s32.totalorder %s154, %s155
      %p167 = scmp.eq.s32.totalorder %s37, 1
      %p168 = por %p166, %p167
      %p170 = scmp.ne.s32.totalorder %s155, %s169
      %p171 = scmp.eq.s32.totalorder %s37, 0
      %p172 = por %p170, %p171
      %s174 = sadd.s32 %s173, 1
      %p177 = scmp.eq.s32.totalorder %s31, 1
      %p178 = scmp.ne.s32.totalorder %s173, %s175
      %p179 = scmp.eq.s32.totalorder %s31, 0
      %p180 = por %p178, %p179
      %p181 = scmp.ne.s32.totalorder %s173, %s175
      %p182 = scmp.eq.s32.totalorder %s36, 1
      %p183 = por %p181, %p182
      %p184 = scmp.ne.s32.totalorder %s175, %s176
      %p185 = scmp.eq.s32.totalorder %s36, 0
      %p186 = por %p184, %p185
      %p187 = scmp.ne.s32.totalorder %s175, %s176
      %p188 = scmp.eq.s32.totalorder %s37, 1
      %p189 = por %p187, %p188
      %p191 = scmp.ne.s32.totalorder %s176, %s190
      %p192 = scmp.eq.s32.totalorder %s37, 0
      %p193 = por %p191, %p192
      %s195 = sadd.s32 %s194, 1
      %p198 = scmp.eq.s32.totalorder %s31, 1
      %p199 = scmp.ne.s32.totalorder %s194, %s196
      %p200 = scmp.eq.s32.totalorder %s31, 0
      %p201 = por %p199, %p200
      %p202 = scmp.ne.s32.totalorder %s194, %s196
      %p203 = scmp.eq.s32.totalorder %s36, 1
      %p204 = por %p202, %p203
      %p205 = scmp.ne.s32.totalorder %s196, %s197
      %p206 = scmp.eq.s32.totalorder %s36, 0
      %p207 = por %p205, %p206
      %p208 = scmp.ne.s32.totalorder %s196, %s197
      %p209 = scmp.eq.s32.totalorder %s37, 1
      %p210 = por %p208, %p209
      %p212 = scmp.ne.s32.totalorder %s197, %s211
      %p213 = scmp.eq.s32.totalorder %s37, 0
      %p214 = por %p212, %p213
      %s216 = sadd.s32 %s215, 1
      %p219 = scmp.eq.s32.totalorder %s31, 1
      %p220 = scmp.ne.s32.totalorder %s215, %s217
      %p221 = scmp.eq.s32.totalorder %s31, 0
      %p222 = por %p220, %p221
      %p223 = scmp.ne.s32.totalorder %s215, %s217
      %p224 = scmp.eq.s32.totalorder %s36, 1
      %p225 = por %p223, %p224
      %p226 = scmp.ne.s32.totalorder %s217, %s218
      %p227 = scmp.eq.s32.totalorder %s36, 0
      %p228 = por %p226, %p227
      %p229 = scmp.ne.s32.totalorder %s217, %s218
      %p230 = scmp.eq.s32.totalorder %s37, 1
      %p231 = por %p229, %p230
      %p233 = scmp.ne.s32.totalorder %s218, %s232
      %p234 = scmp.eq.s32.totalorder %s37, 0
      %p235 = por %p233, %p234
      %s237 = sadd.s32 %s236, 1
      %p240 = scmp.eq.s32.totalorder %s31, 1
      %p241 = scmp.ne.s32.totalorder %s236, %s238
      %p242 = scmp.eq.s32.totalorder %s31, 0
      %p243 = por %p241, %p242
      %p244 = scmp.ne.s32.totalorder %s236, %s238
      %p245 = scmp.eq.s32.totalorder %s36, 1
      %p246 = por %p244, %p245
      %p247 = scmp.ne.s32.totalorder %s238, %s239
      %p248 = scmp.eq.s32.totalorder %s36, 0
      %p249 = por %p247, %p248
      %p250 = scmp.ne.s32.totalorder %s238, %s239
      %p251 = scmp.eq.s32.totalorder %s37, 1
      %p252 = por %p250, %p251
      %p254 = scmp.ne.s32.totalorder %s239, %s253
      %p255 = scmp.eq.s32.totalorder %s37, 0
      %p256 = por %p254, %p255
      %s257 = ssub.s32 %s38, %s50
      %s258 = ssub.s32 %s39, %s46
      %s259 = sor.u32 %s257, %s258
      %p260 = scmp.eq.s32.totalorder %s259, 0
      %s262 = sadd.s32 %s261, 1
      %s263 = scalar_select %p260, %s261, %s262
      %p266 = pneg %p260
      %p267 = scmp.eq.s32.totalorder %s31, 1
      %p268 = por %p266, %p267
      %p269 = scmp.ne.s32.totalorder %s261, %s264
      %p270 = scmp.eq.s32.totalorder %s31, 0
      %p271 = por %p269, %p270
      %p272 = scmp.ne.s32.totalorder %s261, %s264
      %p273 = scmp.eq.s32.totalorder %s36, 1
      %p274 = por %p272, %p273
      %p275 = scmp.ne.s32.totalorder %s264, %s265
      %p276 = scmp.eq.s32.totalorder %s36, 0
      %p277 = por %p275, %p276
      %p278 = scmp.ne.s32.totalorder %s264, %s265
      %p279 = scmp.eq.s32.totalorder %s37, 1
      %p280 = por %p278, %p279
      %p282 = scmp.ne.s32.totalorder %s265, %s281
      %p283 = scmp.eq.s32.totalorder %s37, 0
      %p284 = por %p282, %p283
      %s285 = ssub.s32 %s38, %s50
      %s286 = ssub.s32 %s39, %s46
      %s287 = sor.u32 %s285, %s286
      %p288 = scmp.eq.s32.totalorder %s287, 0
      %s290 = sadd.s32 %s289, 1
      %s291 = scalar_select %p288, %s289, %s290
      %p294 = pneg %p288
      %p295 = scmp.eq.s32.totalorder %s31, 1
      %p296 = por %p294, %p295
      %p297 = scmp.ne.s32.totalorder %s289, %s292
      %p298 = scmp.eq.s32.totalorder %s31, 0
      %p299 = por %p297, %p298
      %p300 = scmp.ne.s32.totalorder %s289, %s292
      %p301 = scmp.eq.s32.totalorder %s36, 1
      %p302 = por %p300, %p301
      %p303 = scmp.ne.s32.totalorder %s292, %s293
      %p304 = scmp.eq.s32.totalorder %s36, 0
      %p305 = por %p303, %p304
      %p306 = scmp.ne.s32.totalorder %s292, %s293
      %p307 = scmp.eq.s32.totalorder %s37, 1
      %p308 = por %p306, %p307
      %p310 = scmp.ne.s32.totalorder %s293, %s309
      %p311 = scmp.eq.s32.totalorder %s37, 0
      %p312 = por %p310, %p311
      %p313 = scmp.le.s32.totalorder 1, %s31
      %p314 = scmp.lt.s32.totalorder %s31, 3
      %p315 = pnand %p313, %p314
      %p316 = pneg %p315
      // Predicated region
      $region9: #{tpu_custom_call.1} parent=5 // pred_check
        _
      $region10: #{tpu_custom_call.1} parent=5 // pred_check_branch
        %318 = sbr.rel (%p315) target = $region12
      $region11: #{tpu_custom_call.1} parent=5 // pred_region
        %s319 = ssub.s32 %s31, 1
        // Predicated region
        $region13: #{tpu_custom_call.1} parent=11 // pred_check
          %p320 = pneg %p144
        $region14: #{tpu_custom_call.1} parent=11 // pred_check_branch
          %322 = sbr.rel (%p320) target = $region16
        $region15: #{tpu_custom_call.1} parent=11 // pred_region
          %324 = vsyncadd [#allocation12], 0
          %s325 = sshll.u32 %s3, 4
          %s326 = int_to_ptr.hbm [resolvable:$true] %s325
          %s327 = sshll.u32 [#allocation11], 4
          %s328 = int_to_ptr.vmem [resolvable:$true] %s327
          %333 = dma.hbm_to_vmem [thread:$0]  %s326, 512, %s328, [#allocation12], 128, 128, 8
        $region16: #{tpu_custom_call.1} parent=11 // pred_fallthru
          _
        // Predicated region
        $region17: #{tpu_custom_call.1} parent=11 // pred_check
          %p334 = pneg %p165
        $region18: #{tpu_custom_call.1} parent=11 // pred_check_branch
          %336 = sbr.rel (%p334) target = $region20
        $region19: #{tpu_custom_call.1} parent=11 // pred_region
          %338 = vsyncadd [#allocation12], 0
          %s339 = sshll.u32 %s4, 4
          %s340 = int_to_ptr.hbm [resolvable:$true] %s339
          %s341 = sshll.u32 [#allocation13], 4
          %s342 = int_to_ptr.vmem [resolvable:$true] %s341
          %347 = dma.hbm_to_vmem [thread:$0]  %s340, 512, %s342, [#allocation12], 128, 128, 8
        $region20: #{tpu_custom_call.1} parent=11 // pred_fallthru
          _
        // Predicated region
        $region21: #{tpu_custom_call.1} parent=11 // pred_check
          %p348 = pneg %p186
        $region22: #{tpu_custom_call.1} parent=11 // pred_check_branch
          %350 = sbr.rel (%p348) target = $region24
        $region23: #{tpu_custom_call.1} parent=11 // pred_region
          %352 = vsyncadd [#allocation15], 0
          %s353 = sshll.u32 %s5, 4
          %s354 = int_to_ptr.hbm [resolvable:$true] %s353
          %s355 = sshll.u32 [#allocation14], 4
          %s356 = int_to_ptr.vmem [resolvable:$true] %s355
          %361 = dma.hbm_to_vmem [thread:$0]  %s354, 512, %s356, [#allocation15], 128, 128, 8
        $region24: #{tpu_custom_call.1} parent=11 // pred_fallthru
          _
        // Predicated region
        $region25: #{tpu_custom_call.1} parent=11 // pred_check
          %p362 = pneg %p207
        $region26: #{tpu_custom_call.1} parent=11 // pred_check_branch
          %364 = sbr.rel (%p362) target = $region28
        $region27: #{tpu_custom_call.1} parent=11 // pred_region
          _
        $region28: #{tpu_custom_call.1} parent=11 // pred_fallthru
          _
        // Predicated region
        $region29: #{tpu_custom_call.1} parent=11 // pred_check
          %p365 = pneg %p228
        $region30: #{tpu_custom_call.1} parent=11 // pred_check_branch
          %367 = sbr.rel (%p365) target = $region32
        $region31: #{tpu_custom_call.1} parent=11 // pred_region
          _
        $region32: #{tpu_custom_call.1} parent=11 // pred_fallthru
          _
        // Predicated region
        $region33: #{tpu_custom_call.1} parent=11 // pred_check
          %p368 = pneg %p249
        $region34: #{tpu_custom_call.1} parent=11 // pred_check_branch
          %370 = sbr.rel (%p368) target = $region36
        $region35: #{tpu_custom_call.1} parent=11 // pred_region
          _
        $region36: #{tpu_custom_call.1} parent=11 // pred_fallthru
          _
      $region12: #{tpu_custom_call.1} parent=5 // pred_fallthru
        _
      %p371 = scmp.lt.s32.totalorder %s31, 2
      // Predicated region
      $region37: #{tpu_custom_call.1} parent=5 // pred_check
        %p372 = pneg %p371
      $region38: #{tpu_custom_call.1} parent=5 // pred_check_branch
        %374 = sbr.rel (%p372) target = $region40
      $region39: #{tpu_custom_call.1} parent=5 // pred_region
        // Predicated region
        $region41: #{tpu_custom_call.1} parent=39 // pred_check
          %p375 = pneg %p65
        $region42: #{tpu_custom_call.1} parent=39 // pred_check_branch
          %377 = sbr.rel (%p375) target = $region44
        $region43: #{tpu_custom_call.1} parent=39 // pred_region
          %s378 = sand.u32 %s55, 1
          %s379 = scalar_lea.sflag [#allocation6], %s378
          %s380 = sand.u32 %s55, 1
          %s381 = smul.addr %s380, 8
          %s382 = scalar_lea.vmem [#allocation5], %s381
          %384 = vsyncadd %s379, 0
          %s385 = sadd.s32 %s39, %s38
          %s386 = smul.addr %s385, 8
          %s387 = scalar_lea.hbm %s0, %s386
          %s389 = sshll.u32 %s387, 4
          %s390 = int_to_ptr.hbm [resolvable:$true] %s389
          %s391 = sshll.u32 %s382, 4
          %s392 = int_to_ptr.vmem [resolvable:$true] %s391
          %394 = dma.hbm_to_vmem [thread:$0]  %s390, 128, %s392, %s379
        $region44: #{tpu_custom_call.1} parent=39 // pred_fallthru
          _
        // Predicated region
        $region45: #{tpu_custom_call.1} parent=39 // pred_check
          %p395 = pneg %p91
        $region46: #{tpu_custom_call.1} parent=39 // pred_check_branch
          %397 = sbr.rel (%p395) target = $region48
        $region47: #{tpu_custom_call.1} parent=39 // pred_region
          %s398 = sand.u32 %s31, 1
          %s399 = scalar_lea.sflag [#allocation9], %s398
          %s400 = sand.u32 %s81, 1
          %s401 = smul.addr %s400, 8
          %s402 = scalar_lea.vmem [#allocation8], %s401
          %404 = vsyncadd %s399, 0
          %s405 = smul.addr %s38, 8
          %s406 = scalar_lea.hbm %s1, %s405
          %s408 = sshll.u32 %s406, 4
          %s409 = int_to_ptr.hbm [resolvable:$true] %s408
          %s410 = sshll.u32 %s402, 4
          %s411 = int_to_ptr.vmem [resolvable:$true] %s410
          %413 = dma.hbm_to_vmem [thread:$0]  %s409, 128, %s411, %s399
        $region48: #{tpu_custom_call.1} parent=39 // pred_fallthru
          _
        // Predicated region
        $region49: #{tpu_custom_call.1} parent=39 // pred_check
          %p414 = pneg %p117
        $region50: #{tpu_custom_call.1} parent=39 // pred_check_branch
          %416 = sbr.rel (%p414) target = $region52
        $region51: #{tpu_custom_call.1} parent=39 // pred_region
          %s417 = sand.u32 %s31, 1
          %s418 = scalar_lea.sflag [#allocation9], %s417
          %s419 = sand.u32 %s107, 1
          %s420 = smul.addr %s419, 8
          %s421 = scalar_lea.vmem [#allocation10], %s420
          %423 = vsyncadd %s418, 0
          %s424 = smul.addr %s38, 8
          %s425 = scalar_lea.hbm %s2, %s424
          %s427 = sshll.u32 %s425, 4
          %s428 = int_to_ptr.hbm [resolvable:$true] %s427
          %s429 = sshll.u32 %s421, 4
          %s430 = int_to_ptr.vmem [resolvable:$true] %s429
          %432 = dma.hbm_to_vmem [thread:$0]  %s428, 128, %s430, %s418
        $region52: #{tpu_custom_call.1} parent=39 // pred_fallthru
          _
      $region40: #{tpu_custom_call.1} parent=5 // pred_fallthru
        _
      %p433 = scmp.le.s32.totalorder 1, %s31
      %p434 = scmp.lt.s32.totalorder %s31, 3
      %p435 = pnand %p433, %p434
      %p436 = pneg %p435
      // Predicated region
      $region53: #{tpu_custom_call.1} parent=5 // pred_check
        _
      $region54: #{tpu_custom_call.1} parent=5 // pred_check_branch
        %438 = sbr.rel (%p435) target = $region56
      $region55: #{tpu_custom_call.1} parent=5 // pred_region
        %s439 = ssub.s32 %s31, 1
        %s440 = sand.u32 %s58, 1
        %s441 = scalar_lea.sflag [#allocation6], %s440
        %s442 = sand.u32 %s58, 1
        %s443 = smul.addr %s442, 8
        %s444 = scalar_lea.vmem [#allocation5], %s443
        // Predicated region
        $region57: #{tpu_custom_call.1} parent=55 // pred_check
          %p445 = pneg %p71
        $region58: #{tpu_custom_call.1} parent=55 // pred_check_branch
          %447 = sbr.rel (%p445) target = $region60
        $region59: #{tpu_custom_call.1} parent=55 // pred_region
          %449 = dma.done %s441, 128
        $region60: #{tpu_custom_call.1} parent=55 // pred_fallthru
          _
        %s450 = sand.u32 %s36, 1
        %s451 = scalar_lea.sflag [#allocation9], %s450
        %s452 = sand.u32 %s84, 1
        %s453 = smul.addr %s452, 8
        %s454 = scalar_lea.vmem [#allocation8], %s453
        // Predicated region
        $region61: #{tpu_custom_call.1} parent=55 // pred_check
          %p455 = pneg %p97
        $region62: #{tpu_custom_call.1} parent=55 // pred_check_branch
          %457 = sbr.rel (%p455) target = $region64
        $region63: #{tpu_custom_call.1} parent=55 // pred_region
          %459 = dma.done %s451, 128
        $region64: #{tpu_custom_call.1} parent=55 // pred_fallthru
          _
        %s460 = sand.u32 %s36, 1
        %s461 = scalar_lea.sflag [#allocation9], %s460
        %s462 = sand.u32 %s110, 1
        %s463 = smul.addr %s462, 8
        %s464 = scalar_lea.vmem [#allocation10], %s463
        // Predicated region
        $region65: #{tpu_custom_call.1} parent=55 // pred_check
          %p465 = pneg %p123
        $region66: #{tpu_custom_call.1} parent=55 // pred_check_branch
          %467 = sbr.rel (%p465) target = $region68
        $region67: #{tpu_custom_call.1} parent=55 // pred_region
          %469 = dma.done %s461, 128
        $region68: #{tpu_custom_call.1} parent=55 // pred_fallthru
          _
        // Predicated region
        $region69: #{tpu_custom_call.1} parent=55 // pred_check
          %p470 = pneg %p144
        $region70: #{tpu_custom_call.1} parent=55 // pred_check_branch
          %472 = sbr.rel (%p470) target = $region72
        $region71: #{tpu_custom_call.1} parent=55 // pred_region
          %474 = dma.done [#allocation12], 512
        $region72: #{tpu_custom_call.1} parent=55 // pred_fallthru
          _
        // Predicated region
        $region73: #{tpu_custom_call.1} parent=55 // pred_check
          %p475 = pneg %p165
        $region74: #{tpu_custom_call.1} parent=55 // pred_check_branch
          %477 = sbr.rel (%p475) target = $region76
        $region75: #{tpu_custom_call.1} parent=55 // pred_region
          %479 = dma.done [#allocation12], 512
        $region76: #{tpu_custom_call.1} parent=55 // pred_fallthru
          _
        // Predicated region
        $region77: #{tpu_custom_call.1} parent=55 // pred_check
          %p480 = pneg %p186
        $region78: #{tpu_custom_call.1} parent=55 // pred_check_branch
          %482 = sbr.rel (%p480) target = $region80
        $region79: #{tpu_custom_call.1} parent=55 // pred_region
          %484 = dma.done [#allocation15], 512
        $region80: #{tpu_custom_call.1} parent=55 // pred_fallthru
          _
        %s485 = sand.u32 %s58, 1
        %s486 = scalar_lea.sflag [#allocation6], %s485
        %s487 = sand.u32 %s58, 1
        %s488 = smul.addr %s487, 8
        %s489 = scalar_lea.vmem [#allocation5], %s488
        %p490 = pneg %p71
        %p491 = pneg %p68
        %s492 = sand.u32 %s36, 1
        %s493 = scalar_lea.sflag [#allocation9], %s492
        %s494 = sand.u32 %s84, 1
        %s495 = smul.addr %s494, 8
        %s496 = scalar_lea.vmem [#allocation8], %s495
        %p497 = pneg %p97
        %p498 = pneg %p94
        %s499 = sand.u32 %s36, 1
        %s500 = scalar_lea.sflag [#allocation9], %s499
        %s501 = sand.u32 %s110, 1
        %s502 = smul.addr %s501, 8
        %s503 = scalar_lea.vmem [#allocation10], %s502
        %p504 = pneg %p123
        %p505 = pneg %p120
        %p506 = pneg %p144
        %p507 = pneg %p141
        %p508 = pneg %p165
        %p509 = pneg %p162
        %p510 = pneg %p186
        %p511 = pneg %p183
        %p512 = pneg %p207
        %p513 = pneg %p204
        %p514 = pneg %p228
        %p515 = pneg %p225
        %p516 = pneg %p249
        %p517 = pneg %p246
        %p518 = pneg %p277
        %p519 = pneg %p274
        %s520 = sand.u32 %s264, 1
        %s521 = scalar_lea.sflag [#allocation7], %s520
        %s522 = sand.u32 %s264, 1
        %s523 = smul.addr %s522, 8
        %s524 = scalar_lea.vmem [#allocation16], %s523
        %p525 = pneg %p305
        %p526 = pneg %p302
        %s527 = sand.u32 %s292, 1
        %s528 = scalar_lea.sflag [#allocation18], %s527
        %s529 = sand.u32 %s292, 1
        %s530 = smul.addr %s529, 32
        %s531 = scalar_lea.vmem [#allocation17], %s530
        %p532 = scmp.eq.s32.totalorder %s41, 0
        // Predicated region
        $region81: #{tpu_custom_call.1} parent=55 // pred_check
          %p533 = pneg %p532
        $region82: #{tpu_custom_call.1} parent=55 // pred_check_branch
          %535 = sbr.rel (%p533) target = $region84
        $region83: #{tpu_custom_call.1} parent=55 // pred_region
          %v536 = vld [vmem:[%s454] sm:$0xff]
          %v537 = vld [vmem:[%s464] sm:$0xff]
          %v538 = vld [vmem:[#allocation13] sm:$0xff]
          %v539 = vld [vmem:[#allocation13 + $0x8] sm:$0xff]
          %v540 = vld [vmem:[#allocation13 + $0x10] sm:$0xff]
          %v541 = vld [vmem:[#allocation13 + $0x18] sm:$0xff]
          %v542 = vld [vmem:[%s7] sm:$0x1]
          %v544 = vperm.slane %v542, 0
          %vm546 = vcmask 261120
          %v548 = vsel %vm546, %v536, 0
          %550 = vmatpush.msra.mxu0 0.0
          %551 = vmatpush.msra.mxu0 0.0
          %552 = vmatpush.msra.mxu0 0.0
          %553 = vmatpush.msra.mxu0 0.0
          %554 = vmatpush.msra.mxu0 0.0
          %555 = vmatpush.msra.mxu0 0.0
          %556 = vmatpush.msra.mxu0 0.0
          %557 = vmatpush.msra.mxu0 0.0
          %558 = vmatpush.msra.mxu0 0.0
          %559 = vmatpush.msra.mxu0 0.0
          %560 = vmatpush.msra.mxu0 0.0
          %561 = vmatpush.msra.mxu0 0.0
          %562 = vmatpush.msra.mxu0 %v541
          %563 = vmatpush.msra.mxu0 %v540
          %564 = vmatpush.msra.mxu0 %v539
          %565 = vmatpush.msra.mxu0 %v538
          %566 = vmatmul.f32.gmra.mxu0 %v548
          %v567 = vpop.f32.mrf.mxu0
          %v568 = vadd.f32 %v544, %v567
          %569 = vdwg.mxu0
          %570 = vst.msk [vmem:[#allocation2] sm:$0xff] %vm546, %v568
          %v571 = vld [vmem:[#allocation14] sm:$0xff]
          %v572 = vld [vmem:[#allocation14 + $0x8] sm:$0xff]
          %v573 = vld [vmem:[#allocation14 + $0x10] sm:$0xff]
          %v574 = vld [vmem:[#allocation14 + $0x18] sm:$0xff]
          %v575 = vld [vmem:[%s8] sm:$0x1]
          %v577 = vperm.slane %v575, 0
          %v580 = vsel %vm546, %v537, 0
          %582 = vmatpush.msra.mxu0 0.0
          %583 = vmatpush.msra.mxu0 0.0
          %584 = vmatpush.msra.mxu0 0.0
          %585 = vmatpush.msra.mxu0 0.0
          %586 = vmatpush.msra.mxu0 0.0
          %587 = vmatpush.msra.mxu0 0.0
          %588 = vmatpush.msra.mxu0 0.0
          %589 = vmatpush.msra.mxu0 0.0
          %590 = vmatpush.msra.mxu0 0.0
          %591 = vmatpush.msra.mxu0 0.0
          %592 = vmatpush.msra.mxu0 0.0
          %593 = vmatpush.msra.mxu0 0.0
          %594 = vmatpush.msra.mxu0 %v574
          %595 = vmatpush.msra.mxu0 %v573
          %596 = vmatpush.msra.mxu0 %v572
          %597 = vmatpush.msra.mxu0 %v571
          %598 = vmatmul.f32.gmra.mxu0 %v580
          %v599 = vpop.f32.mrf.mxu0
          %v600 = vadd.f32 %v577, %v599
          %601 = vdwg.mxu0
          %602 = vst.msk [vmem:[#allocation3] sm:$0xff] %vm546, %v600
        $region84: #{tpu_custom_call.1} parent=55 // pred_fallthru
          _
        %v603 = vld [vmem:[%s444] sm:$0xff]
        %v604 = vld [vmem:[#allocation11] sm:$0xff]
        %v605 = vld [vmem:[#allocation11 + $0x8] sm:$0xff]
        %v606 = vld [vmem:[#allocation11 + $0x10] sm:$0xff]
        %v607 = vld [vmem:[#allocation11 + $0x18] sm:$0xff]
        %v608 = vld [vmem:[%s6] sm:$0x1]
        %v610 = vperm.slane %v608, 0
        %vm612 = vcmask 261120
        %v614 = vsel %vm612, %v603, 0
        %616 = vmatpush.msra.mxu0 0.0
        %617 = vmatpush.msra.mxu0 0.0
        %618 = vmatpush.msra.mxu0 0.0
        %619 = vmatpush.msra.mxu0 0.0
        %620 = vmatpush.msra.mxu0 0.0
        %621 = vmatpush.msra.mxu0 0.0
        %622 = vmatpush.msra.mxu0 0.0
        %623 = vmatpush.msra.mxu0 0.0
        %624 = vmatpush.msra.mxu0 0.0
        %625 = vmatpush.msra.mxu0 0.0
        %626 = vmatpush.msra.mxu0 0.0
        %627 = vmatpush.msra.mxu0 0.0
        %628 = vmatpush.msra.mxu0 %v607
        %629 = vmatpush.msra.mxu0 %v606
        %630 = vmatpush.msra.mxu0 %v605
        %631 = vmatpush.msra.mxu0 %v604
        %632 = vmatmul.f32.gmra.mxu0 %v614
        %v633 = vpop.f32.mrf.mxu0
        %v634 = vadd.f32 %v610, %v633
        %635 = vdwg.mxu0
        %v636 = vmul.f32 %v634, 0.35355338
        %v637 = vld [vmem:[#allocation2] sm:$0xff]
        %v638 = vld [vmem:[#allocation3] sm:$0xff]
        %vm639 = vcmask 64512
        %v641 = vsel %vm639, %v636, 0
        %v644 = vsel %vm639, %v637, 0
        %646 = vmatpush.xpose.msra.mxu0 0.0
        %647 = vmatpush.xpose.msra.mxu0 0.0
        %648 = vmatpush.xpose.msra.mxu0 0.0
        %649 = vmatpush.xpose.msra.mxu0 0.0
        %650 = vmatpush.xpose.msra.mxu0 0.0
        %651 = vmatpush.xpose.msra.mxu0 0.0
        %652 = vmatpush.xpose.msra.mxu0 0.0
        %653 = vmatpush.xpose.msra.mxu0 0.0
        %654 = vmatpush.xpose.msra.mxu0 0.0
        %655 = vmatpush.xpose.msra.mxu0 0.0
        %656 = vmatpush.xpose.msra.mxu0 0.0
        %657 = vmatpush.xpose.msra.mxu0 0.0
        %658 = vmatpush.xpose.msra.mxu0 0.0
        %659 = vmatpush.xpose.msra.mxu0 0.0
        %660 = vmatpush.xpose.msra.mxu0 0.0
        %661 = vmatpush.xpose.msra.mxu0 %v644
        %662 = vmatmul.f32.gmra.mxu0 %v641
        %v663 = vpop.f32.mrf.mxu0
        %v664 = vadd.f32 0.0, %v663
        %665 = vdwg.mxu0
        %v666 = vsel %vm639, %v664, -inf
        %667 = vmax.xlane.f32.xlu0 %v666
        %v668 = vpop.xlane.xlu0 %667
        %v669 = vsub.f32 %v664, %v668
        %v670 = vmul.f32 %v669, 1.442695
        %v671 = vpow.pop %v670
        %v672 = vsel %vm639, %v671, 0.0
        %673 = vadd.xlane.f32.xlu0 %v672
        %v674 = vpop.xlane.xlu0 %673
        %v675 = vrcp.pop %v674
        %v676 = vmul.f32 %v671, %v675
        %677 = vst.msk [vmem:[%s531] sm:$0xff] %vm639, %v676
        %v679 = vsel %vm639, %v676, 0
        %681 = vmatpush.msra.mxu0 0.0
        %682 = vmatpush.msra.mxu0 0.0
        %683 = vmatpush.msra.mxu0 0.0
        %684 = vmatpush.msra.mxu0 0.0
        %685 = vmatpush.msra.mxu0 0.0
        %686 = vmatpush.msra.mxu0 0.0
        %687 = vmatpush.msra.mxu0 0.0
        %688 = vmatpush.msra.mxu0 0.0
        %689 = vmatpush.msra.mxu0 0.0
        %690 = vmatpush.msra.mxu0 0.0
        %691 = vmatpush.msra.mxu0 0.0
        %692 = vmatpush.msra.mxu0 0.0
        %693 = vmatpush.msra.mxu0 0.0
        %694 = vmatpush.msra.mxu0 0.0
        %695 = vmatpush.msra.mxu0 0.0
        %696 = vmatpush.msra.mxu0 %v638
        %697 = vmatmul.f32.gmra.mxu0 %v679
        %v698 = vpop.f32.mrf.mxu0
        %v699 = vadd.f32 0.0, %v698
        %700 = vdwg.mxu0
        %701 = vst.msk [vmem:[#allocation4] sm:$0xff] %vm639, %v699
        %702 = vrot.lane.b32.xlu0 %v636, 120
        %v703 = vpop.permute.xlu0 %702
        %704 = vrot.lane.b32.xlu0 %v637, 120
        %v705 = vpop.permute.xlu0 %704
        %v706 = vsel %vm639, %v703, 0
        %v708 = vsel %vm639, %v705, 0
        %710 = vmatpush.xpose.msra.mxu0 0.0
        %711 = vmatpush.xpose.msra.mxu0 0.0
        %712 = vmatpush.xpose.msra.mxu0 0.0
        %713 = vmatpush.xpose.msra.mxu0 0.0
        %714 = vmatpush.xpose.msra.mxu0 0.0
        %715 = vmatpush.xpose.msra.mxu0 0.0
        %716 = vmatpush.xpose.msra.mxu0 0.0
        %717 = vmatpush.xpose.msra.mxu0 0.0
        %718 = vmatpush.xpose.msra.mxu0 0.0
        %719 = vmatpush.xpose.msra.mxu0 0.0
        %720 = vmatpush.xpose.msra.mxu0 0.0
        %721 = vmatpush.xpose.msra.mxu0 0.0
        %722 = vmatpush.xpose.msra.mxu0 0.0
        %723 = vmatpush.xpose.msra.mxu0 0.0
        %724 = vmatpush.xpose.msra.mxu0 0.0
        %725 = vmatpush.xpose.msra.mxu0 %v708
        %726 = vmatmul.f32.gmra.mxu0 %v706
        %v727 = vpop.f32.mrf.mxu0
        %v728 = vadd.f32 0.0, %v727
        %729 = vdwg.mxu0
        %v730 = vsel %vm639, %v728, -inf
        %731 = vmax.xlane.f32.xlu0 %v730
        %v732 = vpop.xlane.xlu0 %731
        %v733 = vsub.f32 %v728, %v732
        %v734 = vmul.f32 %v733, 1.442695
        %v735 = vpow.pop %v734
        %v736 = vsel %vm639, %v735, 0.0
        %737 = vadd.xlane.f32.xlu0 %v736
        %v738 = vpop.xlane.xlu0 %737
        %v739 = vrcp.pop %v738
        %v740 = vmul.f32 %v735, %v739
        %s741 = scalar_lea.vmem %s531, 8 [#allocation17]
        %742 = vst.msk [vmem:[%s741] sm:$0xff] %vm639, %v740
        %744 = vrot.lane.b32.xlu0 %v638, 120
        %v745 = vpop.permute.xlu0 %744
        %v748 = vsel %vm639, %v740, 0
        %750 = vmatpush.msra.mxu0 0.0
        %751 = vmatpush.msra.mxu0 0.0
        %752 = vmatpush.msra.mxu0 0.0
        %753 = vmatpush.msra.mxu0 0.0
        %754 = vmatpush.msra.mxu0 0.0
        %755 = vmatpush.msra.mxu0 0.0
        %756 = vmatpush.msra.mxu0 0.0
        %757 = vmatpush.msra.mxu0 0.0
        %758 = vmatpush.msra.mxu0 0.0
        %759 = vmatpush.msra.mxu0 0.0
        %760 = vmatpush.msra.mxu0 0.0
        %761 = vmatpush.msra.mxu0 0.0
        %762 = vmatpush.msra.mxu0 0.0
        %763 = vmatpush.msra.mxu0 0.0
        %764 = vmatpush.msra.mxu0 0.0
        %765 = vmatpush.msra.mxu0 %v745
        %766 = vmatmul.f32.gmra.mxu0 %v748
        %v767 = vpop.f32.mrf.mxu0
        %v768 = vadd.f32 0.0, %v767
        %769 = vdwg.mxu0
        %771 = vrot.lane.b32.xlu0 %v768, 8
        %v772 = vpop.permute.xlu0 %771
        %vm774 = vcmask 130112
        %775 = vst.msk [vmem:[#allocation4] sm:$0xff] %vm774, %v772
        %776 = vrot.lane.b32.xlu0 %v636, 112
        %v777 = vpop.permute.xlu0 %776
        %778 = vrot.lane.b32.xlu0 %v637, 112
        %v779 = vpop.permute.xlu0 %778
        %v780 = vsel %vm639, %v777, 0
        %v782 = vsel %vm639, %v779, 0
        %784 = vmatpush.xpose.msra.mxu0 0.0
        %785 = vmatpush.xpose.msra.mxu0 0.0
        %786 = vmatpush.xpose.msra.mxu0 0.0
        %787 = vmatpush.xpose.msra.mxu0 0.0
        %788 = vmatpush.xpose.msra.mxu0 0.0
        %789 = vmatpush.xpose.msra.mxu0 0.0
        %790 = vmatpush.xpose.msra.mxu0 0.0
        %791 = vmatpush.xpose.msra.mxu0 0.0
        %792 = vmatpush.xpose.msra.mxu0 0.0
        %793 = vmatpush.xpose.msra.mxu0 0.0
        %794 = vmatpush.xpose.msra.mxu0 0.0
        %795 = vmatpush.xpose.msra.mxu0 0.0
        %796 = vmatpush.xpose.msra.mxu0 0.0
        %797 = vmatpush.xpose.msra.mxu0 0.0
        %798 = vmatpush.xpose.msra.mxu0 0.0
        %799 = vmatpush.xpose.msra.mxu0 %v782
        %800 = vmatmul.f32.gmra.mxu0 %v780
        %v801 = vpop.f32.mrf.mxu0
        %v802 = vadd.f32 0.0, %v801
        %803 = vdwg.mxu0
        %v804 = vsel %vm639, %v802, -inf
        %805 = vmax.xlane.f32.xlu0 %v804
        %v806 = vpop.xlane.xlu0 %805
        %v807 = vsub.f32 %v802, %v806
        %v808 = vmul.f32 %v807, 1.442695
        %v809 = vpow.pop %v808
        %v810 = vsel %vm639, %v809, 0.0
        %811 = vadd.xlane.f32.xlu0 %v810
        %v812 = vpop.xlane.xlu0 %811
        %v813 = vrcp.pop %v812
        %v814 = vmul.f32 %v809, %v813
        %s815 = scalar_lea.vmem %s531, 16 [#allocation17]
        %816 = vst.msk [vmem:[%s815] sm:$0xff] %vm639, %v814
        %817 = vrot.lane.b32.xlu0 %v638, 112
        %v818 = vpop.permute.xlu0 %817
        %v821 = vsel %vm639, %v814, 0
        %823 = vmatpush.msra.mxu0 0.0
        %824 = vmatpush.msra.mxu0 0.0
        %825 = vmatpush.msra.mxu0 0.0
        %826 = vmatpush.msra.mxu0 0.0
        %827 = vmatpush.msra.mxu0 0.0
        %828 = vmatpush.msra.mxu0 0.0
        %829 = vmatpush.msra.mxu0 0.0
        %830 = vmatpush.msra.mxu0 0.0
        %831 = vmatpush.msra.mxu0 0.0
        %832 = vmatpush.msra.mxu0 0.0
        %833 = vmatpush.msra.mxu0 0.0
        %834 = vmatpush.msra.mxu0 0.0
        %835 = vmatpush.msra.mxu0 0.0
        %836 = vmatpush.msra.mxu0 0.0
        %837 = vmatpush.msra.mxu0 0.0
        %838 = vmatpush.msra.mxu0 %v818
        %839 = vmatmul.f32.gmra.mxu0 %v821
        %v840 = vpop.f32.mrf.mxu0
        %v841 = vadd.f32 0.0, %v840
        %842 = vdwg.mxu0
        %844 = vrot.lane.b32.xlu0 %v841, 16
        %v845 = vpop.permute.xlu0 %844
        %vm847 = vcmask 195712
        %848 = vst.msk [vmem:[#allocation4] sm:$0xff] %vm847, %v845
        %849 = vrot.lane.b32.xlu0 %v636, 104
        %v850 = vpop.permute.xlu0 %849
        %851 = vrot.lane.b32.xlu0 %v637, 104
        %v852 = vpop.permute.xlu0 %851
        %v853 = vsel %vm639, %v850, 0
        %v855 = vsel %vm639, %v852, 0
        %857 = vmatpush.xpose.msra.mxu0 0.0
        %858 = vmatpush.xpose.msra.mxu0 0.0
        %859 = vmatpush.xpose.msra.mxu0 0.0
        %860 = vmatpush.xpose.msra.mxu0 0.0
        %861 = vmatpush.xpose.msra.mxu0 0.0
        %862 = vmatpush.xpose.msra.mxu0 0.0
        %863 = vmatpush.xpose.msra.mxu0 0.0
        %864 = vmatpush.xpose.msra.mxu0 0.0
        %865 = vmatpush.xpose.msra.mxu0 0.0
        %866 = vmatpush.xpose.msra.mxu0 0.0
        %867 = vmatpush.xpose.msra.mxu0 0.0
        %868 = vmatpush.xpose.msra.mxu0 0.0
        %869 = vmatpush.xpose.msra.mxu0 0.0
        %870 = vmatpush.xpose.msra.mxu0 0.0
        %871 = vmatpush.xpose.msra.mxu0 0.0
        %872 = vmatpush.xpose.msra.mxu0 %v855
        %873 = vmatmul.f32.gmra.mxu0 %v853
        %v874 = vpop.f32.mrf.mxu0
        %v875 = vadd.f32 0.0, %v874
        %876 = vdwg.mxu0
        %v877 = vsel %vm639, %v875, -inf
        %878 = vmax.xlane.f32.xlu0 %v877
        %v879 = vpop.xlane.xlu0 %878
        %v880 = vsub.f32 %v875, %v879
        %v881 = vmul.f32 %v880, 1.442695
        %v882 = vpow.pop %v881
        %v883 = vsel %vm639, %v882, 0.0
        %884 = vadd.xlane.f32.xlu0 %v883
        %v885 = vpop.xlane.xlu0 %884
        %v886 = vrcp.pop %v885
        %v887 = vmul.f32 %v882, %v886
        %s888 = scalar_lea.vmem %s531, 24 [#allocation17]
        %889 = vst.msk [vmem:[%s888] sm:$0xff] %vm639, %v887
        %890 = vrot.lane.b32.xlu0 %v638, 104
        %v891 = vpop.permute.xlu0 %890
        %v894 = vsel %vm639, %v887, 0
        %896 = vmatpush.msra.mxu0 0.0
        %897 = vmatpush.msra.mxu0 0.0
        %898 = vmatpush.msra.mxu0 0.0
        %899 = vmatpush.msra.mxu0 0.0
        %900 = vmatpush.msra.mxu0 0.0
        %901 = vmatpush.msra.mxu0 0.0
        %902 = vmatpush.msra.mxu0 0.0
        %903 = vmatpush.msra.mxu0 0.0
        %904 = vmatpush.msra.mxu0 0.0
        %905 = vmatpush.msra.mxu0 0.0
        %906 = vmatpush.msra.mxu0 0.0
        %907 = vmatpush.msra.mxu0 0.0
        %908 = vmatpush.msra.mxu0 0.0
        %909 = vmatpush.msra.mxu0 0.0
        %910 = vmatpush.msra.mxu0 0.0
        %911 = vmatpush.msra.mxu0 %v891
        %912 = vmatmul.f32.gmra.mxu0 %v894
        %v913 = vpop.f32.mrf.mxu0
        %v914 = vadd.f32 0.0, %v913
        %915 = vdwg.mxu0
        %917 = vrot.lane.b32.xlu0 %v914, 24
        %v918 = vpop.permute.xlu0 %917
        %vm920 = vcmask 261312
        %921 = vst.msk [vmem:[#allocation4] sm:$0xff] %vm920, %v918
        %v922 = vld [vmem:[#allocation4] sm:$0xff]
        %923 = vst.msk [vmem:[%s524] sm:$0xff] %vm612, %v922
        %s924 = sand.u32 %s264, 1
        %s925 = scalar_lea.sflag [#allocation7], %s924
        %s926 = sand.u32 %s264, 1
        %s927 = smul.addr %s926, 8
        %s928 = scalar_lea.vmem [#allocation16], %s927
        %s929 = sand.u32 %s292, 1
        %s930 = scalar_lea.sflag [#allocation18], %s929
        %s931 = sand.u32 %s292, 1
        %s932 = smul.addr %s931, 32
        %s933 = scalar_lea.vmem [#allocation17], %s932
        // Predicated region
        $region85: #{tpu_custom_call.1} parent=55 // pred_check
          %p934 = pneg %p274
        $region86: #{tpu_custom_call.1} parent=55 // pred_check_branch
          %936 = sbr.rel (%p934) target = $region88
        $region87: #{tpu_custom_call.1} parent=55 // pred_region
          %938 = vsyncadd %s925, 0
          %s939 = sadd.s32 %s41, %s40
          %s940 = smul.addr %s939, 8
          %s941 = scalar_lea.hbm %s9, %s940
          %s943 = sshll.u32 %s928, 4
          %s944 = int_to_ptr.vmem [resolvable:$true] %s943
          %s945 = sshll.u32 %s941, 4
          %s946 = int_to_ptr.hbm [resolvable:$true] %s945
          %948 = dma.vmem_to_hbm [thread:$0]  %s944, 128, %s946, %s925
        $region88: #{tpu_custom_call.1} parent=55 // pred_fallthru
          _
        // Predicated region
        $region89: #{tpu_custom_call.1} parent=55 // pred_check
          %p949 = pneg %p302
        $region90: #{tpu_custom_call.1} parent=55 // pred_check_branch
          %951 = sbr.rel (%p949) target = $region92
        $region91: #{tpu_custom_call.1} parent=55 // pred_region
          %953 = vsyncadd %s930, 0
          %s954 = sadd.s32 %s41, %s40
          %s955 = smul.addr %s954, 8
          %s956 = scalar_lea.hbm %s10, %s955
          %s957 = sshll.u32 %s933, 4
          %s958 = int_to_ptr.vmem [resolvable:$true] %s957
          %s959 = sshll.u32 %s956, 4
          %s960 = int_to_ptr.hbm [resolvable:$true] %s959
          %965 = dma.vmem_to_hbm [thread:$0]  %s958, 512, %s960, %s930, 128, 256, 8
        $region92: #{tpu_custom_call.1} parent=55 // pred_fallthru
          _
      $region56: #{tpu_custom_call.1} parent=5 // pred_fallthru
        _
      %p966 = scmp.le.s32.totalorder 2, %s31
      // Predicated region
      $region93: #{tpu_custom_call.1} parent=5 // pred_check
        %p967 = pneg %p966
      $region94: #{tpu_custom_call.1} parent=5 // pred_check_branch
        %969 = sbr.rel (%p967) target = $region96
      $region95: #{tpu_custom_call.1} parent=5 // pred_region
        %s970 = ssub.s32 %s31, 2
        // Predicated region
        $region97: #{tpu_custom_call.1} parent=95 // pred_check
          %p971 = pneg %p280
        $region98: #{tpu_custom_call.1} parent=95 // pred_check_branch
          %973 = sbr.rel (%p971) target = $region100
        $region99: #{tpu_custom_call.1} parent=95 // pred_region
          %s974 = sand.u32 %s265, 1
          %s975 = scalar_lea.sflag [#allocation7], %s974
          %s976 = sand.u32 %s265, 1
          %s977 = smul.addr %s976, 8
          %s978 = scalar_lea.vmem [#allocation16], %s977
          %980 = dma.done %s975, 128
        $region100: #{tpu_custom_call.1} parent=95 // pred_fallthru
          _
        // Predicated region
        $region101: #{tpu_custom_call.1} parent=95 // pred_check
          %p981 = pneg %p308
        $region102: #{tpu_custom_call.1} parent=95 // pred_check_branch
          %983 = sbr.rel (%p981) target = $region104
        $region103: #{tpu_custom_call.1} parent=95 // pred_region
          %s984 = sand.u32 %s293, 1
          %s985 = scalar_lea.sflag [#allocation18], %s984
          %s986 = sand.u32 %s293, 1
          %s987 = smul.addr %s986, 32
          %s988 = scalar_lea.vmem [#allocation17], %s987
          %990 = dma.done %s985, 512
        $region104: #{tpu_custom_call.1} parent=95 // pred_fallthru
          _
      $region96: #{tpu_custom_call.1} parent=5 // pred_fallthru
        _
    $region6: #{tpu_custom_call.1} parent=1 // loop_footer
      %s35 = sadd.s32 1, %s31
    $region7: #{tpu_custom_call.1} parent=1 // loop_footer_branch
      %30 = sbr.rel target = $region3
    $region8: #{tpu_custom_call.1} parent=1 // loop_exit
      _
    %991 = vsyncpa [#allocation6], 1
    %s992 = scalar_lea.sflag [#allocation6], 1
    %993 = vsyncpa %s992, 1
    %994 = vsyncpa [#allocation9], 1
    %s995 = scalar_lea.sflag [#allocation9], 1
    %996 = vsyncpa %s995, 1
    %997 = vsyncpa [#allocation12], 1
    %998 = vsyncpa [#allocation15], 1
    %999 = vsyncpa [#allocation7], 1
    %s1000 = scalar_lea.sflag [#allocation7], 1
    %1001 = vsyncpa %s1000, 1
    %1002 = vsyncpa [#allocation18], 1
    %s1003 = scalar_lea.sflag [#allocation18], 1
    %1004 = vsyncpa %s1003, 1

// kernel: tpu_custom_call.1
$region0: #{tpu_custom_call.1}
  #allocation0 [shape = 'u32[]', space=smem, size = 0x4, offset = 0x4, fixed_abs, tag = 'smem constant byte address 0x4 - core index']
  #allocation1 [shape = 'u32[72,128]{1,0:T(1,128)}', space=vmem, size = 0x9000, scoped, tag = 'internal scratch']
  #allocation2 [shape = 'f32[8,32]{1,0:T(8,128)}', space=vmem, size = 0x1000, scoped, tag = 'scratch operand']
  #allocation3 [shape = 'f32[8,32]{1,0:T(8,128)}', space=vmem, size = 0x1000, scoped, tag = 'scratch operand']
  #allocation4 [shape = 'f32[8,32]{1,0:T(8,128)}', space=vmem, size = 0x1000, scoped, tag = 'scratch operand']
  %s0 = inlined_call_operand.hbm [shape: f32[2,8,32], index: 0, kind: input, shape index: {}]
  %s1 = inlined_call_operand.hbm [shape: f32[2,8,32], index: 1, kind: input, shape index: {}]
  %s2 = inlined_call_operand.hbm [shape: f32[2,8,32], index: 2, kind: input, shape index: {}]
  %s3 = inlined_call_operand.hbm [shape: f32[32,32], index: 3, kind: input, shape index: {}]
  %s4 = inlined_call_operand.hbm [shape: f32[32,32], index: 4, kind: input, shape index: {}]
  %s5 = inlined_call_operand.hbm [shape: f32[32,32], index: 5, kind: input, shape index: {}]
  %s6 = inlined_call_operand.vmem [shape: f32[1,32], index: 6, kind: input, shape index: {}]
  %s7 = inlined_call_operand.vmem [shape: f32[1,32], index: 7, kind: input, shape index: {}]
  %s8 = inlined_call_operand.vmem [shape: f32[1,32], index: 8, kind: input, shape index: {}]
  %s9 = inlined_call_operand.hbm [shape: f32[2,8,32], index: 9, kind: output, shape index: {0}]
  %s10 = inlined_call_operand.hbm [shape: f32[4,2,8,8], index: 10, kind: output, shape index: {1}]
  %11 = xla_tuple %s9, %s10
  %s12 = sld [smem:[#allocation0]]
  $region105: #{tpu_custom_call.1} parent=0
    _
  %s14 = ssub.s32 1, %s12
  %s15 = scalar_select 0, %s14, %s12
  $region1: #{tpu_custom_call.1} parent=0
    #allocation5 [shape = 'u8[8192]{0}', space=vmem, size = 0x2000, scoped, tag = 'input window, operand 0']
    #allocation6 [shape = 's32[2]{0}', space=sflag, size = 0x8, scoped, tag = 'scoped memory for tpu_custom_call.1']
    #allocation7 [shape = 's32[2]{0}', space=sflag, size = 0x8, scoped, tag = 'scoped memory for tpu_custom_call.1']
    #allocation8 [shape = 'u8[8192]{0}', space=vmem, size = 0x2000, scoped, tag = 'input window, operand 1']
    #allocation9 [shape = 's32[2]{0}', space=sflag, size = 0x8, scoped, tag = 'scoped memory for tpu_custom_call.1']
    #allocation10 [shape = 'u8[8192]{0}', space=vmem, size = 0x2000, scoped, tag = 'input window, operand 2']
    #allocation11 [shape = 'u8[16384]{0}', space=vmem, size = 0x4000, scoped, tag = 'input window, operand 3, single buffered']
    #allocation12 [shape = 's32[1]{0}', space=sflag, size = 0x4, scoped, tag = 'scoped memory for tpu_custom_call.1']
    #allocation13 [shape = 'u8[16384]{0}', space=vmem, size = 0x4000, scoped, tag = 'input window, operand 4, single buffered']
    #allocation14 [shape = 'u8[16384]{0}', space=vmem, size = 0x4000, scoped, tag = 'input window, operand 5, single buffered']
    #allocation15 [shape = 's32[1]{0}', space=sflag, size = 0x4, scoped, tag = 'scoped memory for tpu_custom_call.1']
    #allocation16 [shape = 'u8[8192]{0}', space=vmem, size = 0x2000, scoped, tag = 'output window, operand 0']
    #allocation17 [shape = 'u8[32768]{0}', space=vmem, size = 0x8000, scoped, tag = 'output window, operand 1']
    #allocation18 [shape = 's32[2]{0}', space=sflag, size = 0x8, scoped, tag = 'scoped memory for tpu_custom_call.1']
    %16 = vsyncpa [#allocation6], 0
    %s17 = scalar_lea.sflag [#allocation6], 1
    %18 = vsyncpa %s17, 0
    %19 = vsyncpa [#allocation9], 0
    %s20 = scalar_lea.sflag [#allocation9], 1
    %21 = vsyncpa %s20, 0
    %22 = vsyncpa [#allocation12], 0
    %23 = vsyncpa [#allocation15], 0
    %24 = vsyncpa [#allocation7], 0
    %s25 = scalar_lea.sflag [#allocation7], 1
    %26 = vsyncpa %s25, 0
    %27 = vsyncpa [#allocation18], 0
    %s28 = scalar_lea.sflag [#allocation18], 1
    %29 = vsyncpa %s28, 0
    loop: start=0, step=1, limit=4
    $region2: #{tpu_custom_call.1} parent=1 // loop_pre_header
      _
    $region3: #{tpu_custom_call.1} parent=1 // loop_header
      %s31 = sphi 0, %s35
      %p32 = scmp.ge.s32.totalorder %s31, 4
      %s38 = sphi 0, %s50
      %s39 = sphi 0, %s46
      %s40 = sphi 0, %s38
      %s41 = sphi 0, %s39
      %s42 = sphi 0, %s40
      %s43 = sphi 0, %s41
      %s55 = sphi 0, %s57
      %s58 = sphi 0, %s55
      %s59 = sphi 0, %s58
      %s75 = sphi 0, %s59
      %s81 = sphi 0, %s83
      %s84 = sphi 0, %s81
      %s85 = sphi 0, %s84
      %s101 = sphi 0, %s85
      %s107 = sphi 0, %s109
      %s110 = sphi 0, %s107
      %s111 = sphi 0, %s110
      %s127 = sphi 0, %s111
      %s131 = sphi 0, %s131
      %s133 = sphi 0, %s131
      %s134 = sphi 0, %s133
      %s148 = sphi 0, %s134
      %s152 = sphi 0, %s152
      %s154 = sphi 0, %s152
      %s155 = sphi 0, %s154
      %s169 = sphi 0, %s155
      %s173 = sphi 0, %s173
      %s175 = sphi 0, %s173
      %s176 = sphi 0, %s175
      %s190 = sphi 0, %s176
      %s194 = sphi 0, %s194
      %s196 = sphi 0, %s194
      %s197 = sphi 0, %s196
      %s211 = sphi 0, %s197
      %s215 = sphi 0, %s215
      %s217 = sphi 0, %s215
      %s218 = sphi 0, %s217
      %s232 = sphi 0, %s218
      %s236 = sphi 0, %s236
      %s238 = sphi 0, %s236
      %s239 = sphi 0, %s238
      %s253 = sphi 0, %s239
      %s261 = sphi 0, %s263
      %s264 = sphi 0, %s261
      %s265 = sphi 0, %s264
      %s281 = sphi 0, %s265
      %s289 = sphi 0, %s291
      %s292 = sphi 0, %s289
      %s293 = sphi 0, %s292
      %s309 = sphi 0, %s293
    $region4: #{tpu_custom_call.1} parent=1 // loop_header_branch
      %34 = sbr.rel (%p32) target = $region8
    $region5: #{tpu_custom_call.1} parent=1 // loop_body
      %s36 = ssub.s32 %s31, 1
      %s37 = ssub.s32 %s31, 2
      %s44 = sadd.s32 1, %s39
      %p45 = scmp.ge.s32.totalorder %s44, 1
      %s46 = scalar_select %p45, 0, %s44
      %s47 = sadd.s32 1, %s38
      %s48 = scalar_select %p45, %s47, %s38
      %p49 = scmp.ge.s32.totalorder %s48, 2
      %s50 = scalar_select %p49, 0, %s48
      %s51 = ssub.s32 %s38, %s50
      %s52 = ssub.s32 %s39, %s46
      %s53 = sor.u32 %s51, %s52
      %p54 = scmp.eq.s32.totalorder %s53, 0
      %s56 = sadd.s32 %s55, 1
      %s57 = scalar_select %p54, %s55, %s56
      %p60 = pneg %p54
      %p61 = scmp.eq.s32.totalorder %s31, 1
      %p62 = por %p60, %p61
      %p63 = scmp.ne.s32.totalorder %s55, %s58
      %p64 = scmp.eq.s32.totalorder %s31, 0
      %p65 = por %p63, %p64
      %p66 = scmp.ne.s32.totalorder %s55, %s58
      %p67 = scmp.eq.s32.totalorder %s36, 1
      %p68 = por %p66, %p67
      %p69 = scmp.ne.s32.totalorder %s58, %s59
      %p70 = scmp.eq.s32.totalorder %s36, 0
      %p71 = por %p69, %p70
      %p72 = scmp.ne.s32.totalorder %s58, %s59
      %p73 = scmp.eq.s32.totalorder %s37, 1
      %p74 = por %p72, %p73
      %p76 = scmp.ne.s32.totalorder %s59, %s75
      %p77 = scmp.eq.s32.totalorder %s37, 0
      %p78 = por %p76, %p77
      %s79 = ssub.s32 %s38, %s50
      %p80 = scmp.eq.s32.totalorder %s79, 0
      %s82 = sadd.s32 %s81, 1
      %s83 = scalar_select %p80, %s81, %s82
      %p86 = pneg %p80
      %p87 = scmp.eq.s32.totalorder %s31, 1
      %p88 = por %p86, %p87
      %p89 = scmp.ne.s32.totalorder %s81, %s84
      %p90 = scmp.eq.s32.totalorder %s31, 0
      %p91 = por %p89, %p90
      %p92 = scmp.ne.s32.totalorder %s81, %s84
      %p93 = scmp.eq.s32.totalorder %s36, 1
      %p94 = por %p92, %p93
      %p95 = scmp.ne.s32.totalorder %s84, %s85
      %p96 = scmp.eq.s32.totalorder %s36, 0
      %p97 = por %p95, %p96
      %p98 = scmp.ne.s32.totalorder %s84, %s85
      %p99 = scmp.eq.s32.totalorder %s37, 1
      %p100 = por %p98, %p99
      %p102 = scmp.ne.s32.totalorder %s85, %s101
      %p103 = scmp.eq.s32.totalorder %s37, 0
      %p104 = por %p102, %p103
      %s105 = ssub.s32 %s38, %s50
      %p106 = scmp.eq.s32.totalorder %s105, 0
      %s108 = sadd.s32 %s107, 1
      %s109 = scalar_select %p106, %s107, %s108
      %p112 = pneg %p106
      %p113 = scmp.eq.s32.totalorder %s31, 1
      %p114 = por %p112, %p113
      %p115 = scmp.ne.s32.totalorder %s107, %s110
      %p116 = scmp.eq.s32.totalorder %s31, 0
      %p117 = por %p115, %p116
      %p118 = scmp.ne.s32.totalorder %s107, %s110
      %p119 = scmp.eq.s32.totalorder %s36, 1
      %p120 = por %p118, %p119
      %p121 = scmp.ne.s32.totalorder %s110, %s111
      %p122 = scmp.eq.s32.totalorder %s36, 0
      %p123 = por %p121, %p122
      %p124 = scmp.ne.s32.totalorder %s110, %s111
      %p125 = scmp.eq.s32.totalorder %s37, 1
      %p126 = por %p124, %p125
      %p128 = scmp.ne.s32.totalorder %s111, %s127
      %p129 = scmp.eq.s32.totalorder %s37, 0
      %p130 = por %p128, %p129
      %s132 = sadd.s32 %s131, 1
      %p135 = scmp.eq.s32.totalorder %s31, 1
      %p136 = scmp.ne.s32.totalorder %s131, %s133
      %p137 = scmp.eq.s32.totalorder %s31, 0
      %p138 = por %p136, %p137
      %p139 = scmp.ne.s32.totalorder %s131, %s133
      %p140 = scmp.eq.s32.totalorder %s36, 1
      %p141 = por %p139, %p140
      %p142 = scmp.ne.s32.totalorder %s133, %s134
      %p143 = scmp.eq.s32.totalorder %s36, 0
      %p144 = por %p142, %p143
      %p145 = scmp.ne.s32.totalorder %s133, %s134
      %p146 = scmp.eq.s32.totalorder %s37, 1
      %p147 = por %p145, %p146
      %p149 = scmp.ne.s32.totalorder %s134, %s148
      %p150 = scmp.eq.s32.totalorder %s37, 0
      %p151 = por %p149, %p150
      %s153 = sadd.s32 %s152, 1
      %p156 = scmp.eq.s32.totalorder %s31, 1
      %p157 = scmp.ne.s32.totalorder %s152, %s154
      %p158 = scmp.eq.s32.totalorder %s31, 0
      %p159 = por %p157, %p158
      %p160 = scmp.ne.s32.totalorder %s152, %s154
      %p161 = scmp.eq.s32.totalorder %s36, 1
      %p162 = por %p160, %p161
      %p163 = scmp.ne.s32.totalorder %s154, %s155
      %p164 = scmp.eq.s32.totalorder %s36, 0
      %p165 = por %p163, %p164
      %p166 = scmp.ne.s32.totalorder %s154, %s155
      %p167 = scmp.eq.s32.totalorder %s37, 1
      %p168 = por %p166, %p167
      %p170 = scmp.ne.s32.totalorder %s155, %s169
      %p171 = scmp.eq.s32.totalorder %s37, 0
      %p172 = por %p170, %p171
      %s174 = sadd.s32 %s173, 1
      %p177 = scmp.eq.s32.totalorder %s31, 1
      %p178 = scmp.ne.s32.totalorder %s173, %s175
      %p179 = scmp.eq.s32.totalorder %s31, 0
      %p180 = por %p178, %p179
      %p181 = scmp.ne.s32.totalorder %s173, %s175
      %p182 = scmp.eq.s32.totalorder %s36, 1
      %p183 = por %p181, %p182
      %p184 = scmp.ne.s32.totalorder %s175, %s176
      %p185 = scmp.eq.s32.totalorder %s36, 0
      %p186 = por %p184, %p185
      %p187 = scmp.ne.s32.totalorder %s175, %s176
      %p188 = scmp.eq.s32.totalorder %s37, 1
      %p189 = por %p187, %p188
      %p191 = scmp.ne.s32.totalorder %s176, %s190
      %p192 = scmp.eq.s32.totalorder %s37, 0
      %p193 = por %p191, %p192
      %s195 = sadd.s32 %s194, 1
      %p198 = scmp.eq.s32.totalorder %s31, 1
      %p199 = scmp.ne.s32.totalorder %s194, %s196
      %p200 = scmp.eq.s32.totalorder %s31, 0
      %p201 = por %p199, %p200
      %p202 = scmp.ne.s32.totalorder %s194, %s196
      %p203 = scmp.eq.s32.totalorder %s36, 1
      %p204 = por %p202, %p203
      %p205 = scmp.ne.s32.totalorder %s196, %s197
      %p206 = scmp.eq.s32.totalorder %s36, 0
      %p207 = por %p205, %p206
      %p208 = scmp.ne.s32.totalorder %s196, %s197
      %p209 = scmp.eq.s32.totalorder %s37, 1
      %p210 = por %p208, %p209
      %p212 = scmp.ne.s32.totalorder %s197, %s211
      %p213 = scmp.eq.s32.totalorder %s37, 0
      %p214 = por %p212, %p213
      %s216 = sadd.s32 %s215, 1
      %p219 = scmp.eq.s32.totalorder %s31, 1
      %p220 = scmp.ne.s32.totalorder %s215, %s217
      %p221 = scmp.eq.s32.totalorder %s31, 0
      %p222 = por %p220, %p221
      %p223 = scmp.ne.s32.totalorder %s215, %s217
      %p224 = scmp.eq.s32.totalorder %s36, 1
      %p225 = por %p223, %p224
      %p226 = scmp.ne.s32.totalorder %s217, %s218
      %p227 = scmp.eq.s32.totalorder %s36, 0
      %p228 = por %p226, %p227
      %p229 = scmp.ne.s32.totalorder %s217, %s218
      %p230 = scmp.eq.s32.totalorder %s37, 1
      %p231 = por %p229, %p230
      %p233 = scmp.ne.s32.totalorder %s218, %s232
      %p234 = scmp.eq.s32.totalorder %s37, 0
      %p235 = por %p233, %p234
      %s237 = sadd.s32 %s236, 1
      %p240 = scmp.eq.s32.totalorder %s31, 1
      %p241 = scmp.ne.s32.totalorder %s236, %s238
      %p242 = scmp.eq.s32.totalorder %s31, 0
      %p243 = por %p241, %p242
      %p244 = scmp.ne.s32.totalorder %s236, %s238
      %p245 = scmp.eq.s32.totalorder %s36, 1
      %p246 = por %p244, %p245
      %p247 = scmp.ne.s32.totalorder %s238, %s239
      %p248 = scmp.eq.s32.totalorder %s36, 0
      %p249 = por %p247, %p248
      %p250 = scmp.ne.s32.totalorder %s238, %s239
      %p251 = scmp.eq.s32.totalorder %s37, 1
      %p252 = por %p250, %p251
      %p254 = scmp.ne.s32.totalorder %s239, %s253
      %p255 = scmp.eq.s32.totalorder %s37, 0
      %p256 = por %p254, %p255
      %s257 = ssub.s32 %s38, %s50
      %s258 = ssub.s32 %s39, %s46
      %s259 = sor.u32 %s257, %s258
      %p260 = scmp.eq.s32.totalorder %s259, 0
      %s262 = sadd.s32 %s261, 1
      %s263 = scalar_select %p260, %s261, %s262
      %p266 = pneg %p260
      %p267 = scmp.eq.s32.totalorder %s31, 1
      %p268 = por %p266, %p267
      %p269 = scmp.ne.s32.totalorder %s261, %s264
      %p270 = scmp.eq.s32.totalorder %s31, 0
      %p271 = por %p269, %p270
      %p272 = scmp.ne.s32.totalorder %s261, %s264
      %p273 = scmp.eq.s32.totalorder %s36, 1
      %p274 = por %p272, %p273
      %p275 = scmp.ne.s32.totalorder %s264, %s265
      %p276 = scmp.eq.s32.totalorder %s36, 0
      %p277 = por %p275, %p276
      %p278 = scmp.ne.s32.totalorder %s264, %s265
      %p279 = scmp.eq.s32.totalorder %s37, 1
      %p280 = por %p278, %p279
      %p282 = scmp.ne.s32.totalorder %s265, %s281
      %p283 = scmp.eq.s32.totalorder %s37, 0
      %p284 = por %p282, %p283
      %s285 = ssub.s32 %s38, %s50
      %s286 = ssub.s32 %s39, %s46
      %s287 = sor.u32 %s285, %s286
      %p288 = scmp.eq.s32.totalorder %s287, 0
      %s290 = sadd.s32 %s289, 1
      %s291 = scalar_select %p288, %s289, %s290
      %p294 = pneg %p288
      %p295 = scmp.eq.s32.totalorder %s31, 1
      %p296 = por %p294, %p295
      %p297 = scmp.ne.s32.totalorder %s289, %s292
      %p298 = scmp.eq.s32.totalorder %s31, 0
      %p299 = por %p297, %p298
      %p300 = scmp.ne.s32.totalorder %s289, %s292
      %p301 = scmp.eq.s32.totalorder %s36, 1
      %p302 = por %p300, %p301
      %p303 = scmp.ne.s32.totalorder %s292, %s293
      %p304 = scmp.eq.s32.totalorder %s36, 0
      %p305 = por %p303, %p304
      %p306 = scmp.ne.s32.totalorder %s292, %s293
      %p307 = scmp.eq.s32.totalorder %s37, 1
      %p308 = por %p306, %p307
      %p310 = scmp.ne.s32.totalorder %s293, %s309
      %p311 = scmp.eq.s32.totalorder %s37, 0
      %p312 = por %p310, %p311
      %p313 = scmp.le.s32.totalorder 1, %s31
      %p314 = scmp.lt.s32.totalorder %s31, 3
      %p315 = pnand %p313, %p314
      %p316 = pneg %p315
      // Predicated region
      $region9: #{tpu_custom_call.1} parent=5 // pred_check
        _
      $region10: #{tpu_custom_call.1} parent=5 // pred_check_branch
        %318 = sbr.rel (%p315) target = $region12
      $region11: #{tpu_custom_call.1} parent=5 // pred_region
        %s319 = ssub.s32 %s31, 1
        // Predicated region
        $region13: #{tpu_custom_call.1} parent=11 // pred_check
          %p320 = pneg %p144
        $region14: #{tpu_custom_call.1} parent=11 // pred_check_branch
          %322 = sbr.rel (%p320) target = $region16
        $region15: #{tpu_custom_call.1} parent=11 // pred_region
          %324 = vsyncadd [#allocation12], 0
          %s325 = sshll.u32 %s3, 4
          %s326 = int_to_ptr.hbm [resolvable:$true] %s325
          %s327 = sshll.u32 [#allocation11], 4
          %s328 = int_to_ptr.vmem [resolvable:$true] %s327
          %333 = dma.hbm_to_vmem [thread:$0]  %s326, 512, %s328, [#allocation12], 128, 128, 8
        $region16: #{tpu_custom_call.1} parent=11 // pred_fallthru
          _
        // Predicated region
        $region17: #{tpu_custom_call.1} parent=11 // pred_check
          %p334 = pneg %p165
        $region18: #{tpu_custom_call.1} parent=11 // pred_check_branch
          %336 = sbr.rel (%p334) target = $region20
        $region19: #{tpu_custom_call.1} parent=11 // pred_region
          %338 = vsyncadd [#allocation12], 0
          %s339 = sshll.u32 %s4, 4
          %s340 = int_to_ptr.hbm [resolvable:$true] %s339
          %s341 = sshll.u32 [#allocation13], 4
          %s342 = int_to_ptr.vmem [resolvable:$true] %s341
          %347 = dma.hbm_to_vmem [thread:$0]  %s340, 512, %s342, [#allocation12], 128, 128, 8
        $region20: #{tpu_custom_call.1} parent=11 // pred_fallthru
          _
        // Predicated region
        $region21: #{tpu_custom_call.1} parent=11 // pred_check
          %p348 = pneg %p186
        $region22: #{tpu_custom_call.1} parent=11 // pred_check_branch
          %350 = sbr.rel (%p348) target = $region24
        $region23: #{tpu_custom_call.1} parent=11 // pred_region
          %352 = vsyncadd [#allocation15], 0
          %s353 = sshll.u32 %s5, 4
          %s354 = int_to_ptr.hbm [resolvable:$true] %s353
          %s355 = sshll.u32 [#allocation14], 4
          %s356 = int_to_ptr.vmem [resolvable:$true] %s355
          %361 = dma.hbm_to_vmem [thread:$0]  %s354, 512, %s356, [#allocation15], 128, 128, 8
        $region24: #{tpu_custom_call.1} parent=11 // pred_fallthru
          _
        // Predicated region
        $region25: #{tpu_custom_call.1} parent=11 // pred_check
          %p362 = pneg %p207
        $region26: #{tpu_custom_call.1} parent=11 // pred_check_branch
          %364 = sbr.rel (%p362) target = $region28
        $region27: #{tpu_custom_call.1} parent=11 // pred_region
          _
        $region28: #{tpu_custom_call.1} parent=11 // pred_fallthru
          _
        // Predicated region
        $region29: #{tpu_custom_call.1} parent=11 // pred_check
          %p365 = pneg %p228
        $region30: #{tpu_custom_call.1} parent=11 // pred_check_branch
          %367 = sbr.rel (%p365) target = $region32
        $region31: #{tpu_custom_call.1} parent=11 // pred_region
          _
        $region32: #{tpu_custom_call.1} parent=11 // pred_fallthru
          _
        // Predicated region
        $region33: #{tpu_custom_call.1} parent=11 // pred_check
          %p368 = pneg %p249
        $region34: #{tpu_custom_call.1} parent=11 // pred_check_branch
          %370 = sbr.rel (%p368) target = $region36
        $region35: #{tpu_custom_call.1} parent=11 // pred_region
          _
        $region36: #{tpu_custom_call.1} parent=11 // pred_fallthru
          _
      $region12: #{tpu_custom_call.1} parent=5 // pred_fallthru
        _
      %p371 = scmp.lt.s32.totalorder %s31, 2
      // Predicated region
      $region37: #{tpu_custom_call.1} parent=5 // pred_check
        %p372 = pneg %p371
      $region38: #{tpu_custom_call.1} parent=5 // pred_check_branch
        %374 = sbr.rel (%p372) target = $region40
      $region39: #{tpu_custom_call.1} parent=5 // pred_region
        // Predicated region
        $region41: #{tpu_custom_call.1} parent=39 // pred_check
          %p375 = pneg %p65
        $region42: #{tpu_custom_call.1} parent=39 // pred_check_branch
          %377 = sbr.rel (%p375) target = $region44
        $region43: #{tpu_custom_call.1} parent=39 // pred_region
          %s378 = sand.u32 %s55, 1
          %s379 = scalar_lea.sflag [#allocation6], %s378
          %s380 = sand.u32 %s55, 1
          %s381 = smul.addr %s380, 8
          %s382 = scalar_lea.vmem [#allocation5], %s381
          %384 = vsyncadd %s379, 0
          %s385 = sadd.s32 %s39, %s38
          %s386 = smul.addr %s385, 8
          %s387 = scalar_lea.hbm %s0, %s386
          %s389 = sshll.u32 %s387, 4
          %s390 = int_to_ptr.hbm [resolvable:$true] %s389
          %s391 = sshll.u32 %s382, 4
          %s392 = int_to_ptr.vmem [resolvable:$true] %s391
          %394 = dma.hbm_to_vmem [thread:$0]  %s390, 128, %s392, %s379
        $region44: #{tpu_custom_call.1} parent=39 // pred_fallthru
          _
        // Predicated region
        $region45: #{tpu_custom_call.1} parent=39 // pred_check
          %p395 = pneg %p91
        $region46: #{tpu_custom_call.1} parent=39 // pred_check_branch
          %397 = sbr.rel (%p395) target = $region48
        $region47: #{tpu_custom_call.1} parent=39 // pred_region
          %s398 = sand.u32 %s31, 1
          %s399 = scalar_lea.sflag [#allocation9], %s398
          %s400 = sand.u32 %s81, 1
          %s401 = smul.addr %s400, 8
          %s402 = scalar_lea.vmem [#allocation8], %s401
          %404 = vsyncadd %s399, 0
          %s405 = smul.addr %s38, 8
          %s406 = scalar_lea.hbm %s1, %s405
          %s408 = sshll.u32 %s406, 4
          %s409 = int_to_ptr.hbm [resolvable:$true] %s408
          %s410 = sshll.u32 %s402, 4
          %s411 = int_to_ptr.vmem [resolvable:$true] %s410
          %413 = dma.hbm_to_vmem [thread:$0]  %s409, 128, %s411, %s399
        $region48: #{tpu_custom_call.1} parent=39 // pred_fallthru
          _
        // Predicated region
        $region49: #{tpu_custom_call.1} parent=39 // pred_check
          %p414 = pneg %p117
        $region50: #{tpu_custom_call.1} parent=39 // pred_check_branch
          %416 = sbr.rel (%p414) target = $region52
        $region51: #{tpu_custom_call.1} parent=39 // pred_region
          %s417 = sand.u32 %s31, 1
          %s418 = scalar_lea.sflag [#allocation9], %s417
          %s419 = sand.u32 %s107, 1
          %s420 = smul.addr %s419, 8
          %s421 = scalar_lea.vmem [#allocation10], %s420
          %423 = vsyncadd %s418, 0
          %s424 = smul.addr %s38, 8
          %s425 = scalar_lea.hbm %s2, %s424
          %s427 = sshll.u32 %s425, 4
          %s428 = int_to_ptr.hbm [resolvable:$true] %s427
          %s429 = sshll.u32 %s421, 4
          %s430 = int_to_ptr.vmem [resolvable:$true] %s429
          %432 = dma.hbm_to_vmem [thread:$0]  %s428, 128, %s430, %s418
        $region52: #{tpu_custom_call.1} parent=39 // pred_fallthru
          _
      $region40: #{tpu_custom_call.1} parent=5 // pred_fallthru
        _
      %p433 = scmp.le.s32.totalorder 1, %s31
      %p434 = scmp.lt.s32.totalorder %s31, 3
      %p435 = pnand %p433, %p434
      %p436 = pneg %p435
      // Predicated region
      $region53: #{tpu_custom_call.1} parent=5 // pred_check
        _
      $region54: #{tpu_custom_call.1} parent=5 // pred_check_branch
        %438 = sbr.rel (%p435) target = $region56
      $region55: #{tpu_custom_call.1} parent=5 // pred_region
        %s439 = ssub.s32 %s31, 1
        %s440 = sand.u32 %s58, 1
        %s441 = scalar_lea.sflag [#allocation6], %s440
        %s442 = sand.u32 %s58, 1
        %s443 = smul.addr %s442, 8
        %s444 = scalar_lea.vmem [#allocation5], %s443
        // Predicated region
        $region57: #{tpu_custom_call.1} parent=55 // pred_check
          %p445 = pneg %p71
        $region58: #{tpu_custom_call.1} parent=55 // pred_check_branch
          %447 = sbr.rel (%p445) target = $region60
        $region59: #{tpu_custom_call.1} parent=55 // pred_region
          %449 = dma.done %s441, 128
        $region60: #{tpu_custom_call.1} parent=55 // pred_fallthru
          _
        %s450 = sand.u32 %s36, 1
        %s451 = scalar_lea.sflag [#allocation9], %s450
        %s452 = sand.u32 %s84, 1
        %s453 = smul.addr %s452, 8
        %s454 = scalar_lea.vmem [#allocation8], %s453
        // Predicated region
        $region61: #{tpu_custom_call.1} parent=55 // pred_check
          %p455 = pneg %p97
        $region62: #{tpu_custom_call.1} parent=55 // pred_check_branch
          %457 = sbr.rel (%p455) target = $region64
        $region63: #{tpu_custom_call.1} parent=55 // pred_region
          %459 = dma.done %s451, 128
        $region64: #{tpu_custom_call.1} parent=55 // pred_fallthru
          _
        %s460 = sand.u32 %s36, 1
        %s461 = scalar_lea.sflag [#allocation9], %s460
        %s462 = sand.u32 %s110, 1
        %s463 = smul.addr %s462, 8
        %s464 = scalar_lea.vmem [#allocation10], %s463
        // Predicated region
        $region65: #{tpu_custom_call.1} parent=55 // pred_check
          %p465 = pneg %p123
        $region66: #{tpu_custom_call.1} parent=55 // pred_check_branch
          %467 = sbr.rel (%p465) target = $region68
        $region67: #{tpu_custom_call.1} parent=55 // pred_region
          %469 = dma.done %s461, 128
        $region68: #{tpu_custom_call.1} parent=55 // pred_fallthru
          _
        // Predicated region
        $region69: #{tpu_custom_call.1} parent=55 // pred_check
          %p470 = pneg %p144
        $region70: #{tpu_custom_call.1} parent=55 // pred_check_branch
          %472 = sbr.rel (%p470) target = $region72
        $region71: #{tpu_custom_call.1} parent=55 // pred_region
          %474 = dma.done [#allocation12], 512
        $region72: #{tpu_custom_call.1} parent=55 // pred_fallthru
          _
        // Predicated region
        $region73: #{tpu_custom_call.1} parent=55 // pred_check
          %p475 = pneg %p165
        $region74: #{tpu_custom_call.1} parent=55 // pred_check_branch
          %477 = sbr.rel (%p475) target = $region76
        $region75: #{tpu_custom_call.1} parent=55 // pred_region
          %479 = dma.done [#allocation12], 512
        $region76: #{tpu_custom_call.1} parent=55 // pred_fallthru
          _
        // Predicated region
        $region77: #{tpu_custom_call.1} parent=55 // pred_check
          %p480 = pneg %p186
        $region78: #{tpu_custom_call.1} parent=55 // pred_check_branch
          %482 = sbr.rel (%p480) target = $region80
        $region79: #{tpu_custom_call.1} parent=55 // pred_region
          %484 = dma.done [#allocation15], 512
        $region80: #{tpu_custom_call.1} parent=55 // pred_fallthru
          _
        %s485 = sand.u32 %s58, 1
        %s486 = scalar_lea.sflag [#allocation6], %s485
        %s487 = sand.u32 %s58, 1
        %s488 = smul.addr %s487, 8
        %s489 = scalar_lea.vmem [#allocation5], %s488
        %p490 = pneg %p71
        %p491 = pneg %p68
        %s492 = sand.u32 %s36, 1
        %s493 = scalar_lea.sflag [#allocation9], %s492
        %s494 = sand.u32 %s84, 1
        %s495 = smul.addr %s494, 8
        %s496 = scalar_lea.vmem [#allocation8], %s495
        %p497 = pneg %p97
        %p498 = pneg %p94
        %s499 = sand.u32 %s36, 1
        %s500 = scalar_lea.sflag [#allocation9], %s499
        %s501 = sand.u32 %s110, 1
        %s502 = smul.addr %s501, 8
        %s503 = scalar_lea.vmem [#allocation10], %s502
        %p504 = pneg %p123
        %p505 = pneg %p120
        %p506 = pneg %p144
        %p507 = pneg %p141
        %p508 = pneg %p165
        %p509 = pneg %p162
        %p510 = pneg %p186
        %p511 = pneg %p183
        %p512 = pneg %p207
        %p513 = pneg %p204
        %p514 = pneg %p228
        %p515 = pneg %p225
        %p516 = pneg %p249
        %p517 = pneg %p246
        %p518 = pneg %p277
        %p519 = pneg %p274
        %s520 = sand.u32 %s264, 1
        %s521 = scalar_lea.sflag [#allocation7], %s520
        %s522 = sand.u32 %s264, 1
        %s523 = smul.addr %s522, 8
        %s524 = scalar_lea.vmem [#allocation16], %s523
        %p525 = pneg %p305
        %p526 = pneg %p302
        %s527 = sand.u32 %s292, 1
        %s528 = scalar_lea.sflag [#allocation18], %s527
        %s529 = sand.u32 %s292, 1
        %s530 = smul.addr %s529, 32
        %s531 = scalar_lea.vmem [#allocation17], %s530
        %p532 = scmp.eq.s32.totalorder %s41, 0
        // Predicated region
        $region81: #{tpu_custom_call.1} parent=55 // pred_check
          %p533 = pneg %p532
        $region82: #{tpu_custom_call.1} parent=55 // pred_check_branch
          %535 = sbr.rel (%p533) target = $region84
        $region83: #{tpu_custom_call.1} parent=55 // pred_region
          %v536 = vld [vmem:[%s454] sm:$0xff]
          %v537 = vld [vmem:[%s464] sm:$0xff]
          %v538 = vld [vmem:[#allocation13] sm:$0xff]
          %v539 = vld [vmem:[#allocation13 + $0x8] sm:$0xff]
          %v540 = vld [vmem:[#allocation13 + $0x10] sm:$0xff]
          %v541 = vld [vmem:[#allocation13 + $0x18] sm:$0xff]
          %v542 = vld [vmem:[%s7] sm:$0x1]
          %v544 = vperm.slane %v542, 0
          %vm546 = vcmask 261120
          %v548 = vsel %vm546, %v536, 0
          %550 = vmatpush.msra.mxu0 0.0
          %551 = vmatpush.msra.mxu0 0.0
          %552 = vmatpush.msra.mxu0 0.0
          %553 = vmatpush.msra.mxu0 0.0
          %554 = vmatpush.msra.mxu0 0.0
          %555 = vmatpush.msra.mxu0 0.0
          %556 = vmatpush.msra.mxu0 0.0
          %557 = vmatpush.msra.mxu0 0.0
          %558 = vmatpush.msra.mxu0 0.0
          %559 = vmatpush.msra.mxu0 0.0
          %560 = vmatpush.msra.mxu0 0.0
          %561 = vmatpush.msra.mxu0 0.0
          %562 = vmatpush.msra.mxu0 %v541
          %563 = vmatpush.msra.mxu0 %v540
          %564 = vmatpush.msra.mxu0 %v539
          %565 = vmatpush.msra.mxu0 %v538
          %566 = vmatmul.f32.gmra.mxu0 %v548
          %v567 = vpop.f32.mrf.mxu0
          %v568 = vadd.f32 %v544, %v567
          %569 = vdwg.mxu0
          %570 = vst.msk [vmem:[#allocation2] sm:$0xff] %vm546, %v568
          %v571 = vld [vmem:[#allocation14] sm:$0xff]
          %v572 = vld [vmem:[#allocation14 + $0x8] sm:$0xff]
          %v573 = vld [vmem:[#allocation14 + $0x10] sm:$0xff]
          %v574 = vld [vmem:[#allocation14 + $0x18] sm:$0xff]
          %v575 = vld [vmem:[%s8] sm:$0x1]
          %v577 = vperm.slane %v575, 0
          %v580 = vsel %vm546, %v537, 0
          %582 = vmatpush.msra.mxu0 0.0
          %583 = vmatpush.msra.mxu0 0.0
          %584 = vmatpush.msra.mxu0 0.0
          %585 = vmatpush.msra.mxu0 0.0
          %586 = vmatpush.msra.mxu0 0.0
          %587 = vmatpush.msra.mxu0 0.0
          %588 = vmatpush.msra.mxu0 0.0
          %589 = vmatpush.msra.mxu0 0.0
          %590 = vmatpush.msra.mxu0 0.0
          %591 = vmatpush.msra.mxu0 0.0
          %592 = vmatpush.msra.mxu0 0.0
          %593 = vmatpush.msra.mxu0 0.0
          %594 = vmatpush.msra.mxu0 %v574
          %595 = vmatpush.msra.mxu0 %v573
          %596 = vmatpush.msra.mxu0 %v572
          %597 = vmatpush.msra.mxu0 %v571
          %598 = vmatmul.f32.gmra.mxu0 %v580
          %v599 = vpop.f32.mrf.mxu0
          %v600 = vadd.f32 %v577, %v599
          %601 = vdwg.mxu0
          %602 = vst.msk [vmem:[#allocation3] sm:$0xff] %vm546, %v600
        $region84: #{tpu_custom_call.1} parent=55 // pred_fallthru
          _
        %v603 = vld [vmem:[%s444] sm:$0xff]
        %v604 = vld [vmem:[#allocation11] sm:$0xff]
        %v605 = vld [vmem:[#allocation11 + $0x8] sm:$0xff]
        %v606 = vld [vmem:[#allocation11 + $0x10] sm:$0xff]
        %v607 = vld [vmem:[#allocation11 + $0x18] sm:$0xff]
        %v608 = vld [vmem:[%s6] sm:$0x1]
        %v610 = vperm.slane %v608, 0
        %vm612 = vcmask 261120
        %v614 = vsel %vm612, %v603, 0
        %616 = vmatpush.msra.mxu0 0.0
        %617 = vmatpush.msra.mxu0 0.0
        %618 = vmatpush.msra.mxu0 0.0
        %619 = vmatpush.msra.mxu0 0.0
        %620 = vmatpush.msra.mxu0 0.0
        %621 = vmatpush.msra.mxu0 0.0
        %622 = vmatpush.msra.mxu0 0.0
        %623 = vmatpush.msra.mxu0 0.0
        %624 = vmatpush.msra.mxu0 0.0
        %625 = vmatpush.msra.mxu0 0.0
        %626 = vmatpush.msra.mxu0 0.0
        %627 = vmatpush.msra.mxu0 0.0
        %628 = vmatpush.msra.mxu0 %v607
        %629 = vmatpush.msra.mxu0 %v606
        %630 = vmatpush.msra.mxu0 %v605
        %631 = vmatpush.msra.mxu0 %v604
        %632 = vmatmul.f32.gmra.mxu0 %v614
        %v633 = vpop.f32.mrf.mxu0
        %v634 = vadd.f32 %v610, %v633
        %635 = vdwg.mxu0
        %v636 = vmul.f32 %v634, 0.35355338
        %v637 = vld [vmem:[#allocation2] sm:$0xff]
        %v638 = vld [vmem:[#allocation3] sm:$0xff]
        %vm639 = vcmask 64512
        %v641 = vsel %vm639, %v636, 0
        %v644 = vsel %vm639, %v637, 0
        %646 = vmatpush.xpose.msra.mxu0 0.0
        %647 = vmatpush.xpose.msra.mxu0 0.0
        %648 = vmatpush.xpose.msra.mxu0 0.0
        %649 = vmatpush.xpose.msra.mxu0 0.0
        %650 = vmatpush.xpose.msra.mxu0 0.0
        %651 = vmatpush.xpose.msra.mxu0 0.0
        %652 = vmatpush.xpose.msra.mxu0 0.0
        %653 = vmatpush.xpose.msra.mxu0 0.0
        %654 = vmatpush.xpose.msra.mxu0 0.0
        %655 = vmatpush.xpose.msra.mxu0 0.0
        %656 = vmatpush.xpose.msra.mxu0 0.0
        %657 = vmatpush.xpose.msra.mxu0 0.0
        %658 = vmatpush.xpose.msra.mxu0 0.0
        %659 = vmatpush.xpose.msra.mxu0 0.0
        %660 = vmatpush.xpose.msra.mxu0 0.0
        %661 = vmatpush.xpose.msra.mxu0 %v644
        %662 = vmatmul.f32.gmra.mxu0 %v641
        %v663 = vpop.f32.mrf.mxu0
        %v664 = vadd.f32 0.0, %v663
        %665 = vdwg.mxu0
        %v666 = vsel %vm639, %v664, -inf
        %667 = vmax.xlane.f32.xlu0 %v666
        %v668 = vpop.xlane.xlu0 %667
        %v669 = vsub.f32 %v664, %v668
        %v670 = vmul.f32 %v669, 1.442695
        %v671 = vpow.pop %v670
        %v672 = vsel %vm639, %v671, 0.0
        %673 = vadd.xlane.f32.xlu0 %v672
        %v674 = vpop.xlane.xlu0 %673
        %v675 = vrcp.pop %v674
        %v676 = vmul.f32 %v671, %v675
        %677 = vst.msk [vmem:[%s531] sm:$0xff] %vm639, %v676
        %v679 = vsel %vm639, %v676, 0
        %681 = vmatpush.msra.mxu0 0.0
        %682 = vmatpush.msra.mxu0 0.0
        %683 = vmatpush.msra.mxu0 0.0
        %684 = vmatpush.msra.mxu0 0.0
        %685 = vmatpush.msra.mxu0 0.0
        %686 = vmatpush.msra.mxu0 0.0
        %687 = vmatpush.msra.mxu0 0.0
        %688 = vmatpush.msra.mxu0 0.0
        %689 = vmatpush.msra.mxu0 0.0
        %690 = vmatpush.msra.mxu0 0.0
        %691 = vmatpush.msra.mxu0 0.0
        %692 = vmatpush.msra.mxu0 0.0
        %693 = vmatpush.msra.mxu0 0.0
        %694 = vmatpush.msra.mxu0 0.0
        %695 = vmatpush.msra.mxu0 0.0
        %696 = vmatpush.msra.mxu0 %v638
        %697 = vmatmul.f32.gmra.mxu0 %v679
        %v698 = vpop.f32.mrf.mxu0
        %v699 = vadd.f32 0.0, %v698
        %700 = vdwg.mxu0
        %701 = vst.msk [vmem:[#allocation4] sm:$0xff] %vm639, %v699
        %702 = vrot.lane.b32.xlu0 %v636, 120
        %v703 = vpop.permute.xlu0 %702
        %704 = vrot.lane.b32.xlu0 %v637, 120
        %v705 = vpop.permute.xlu0 %704
        %v706 = vsel %vm639, %v703, 0
        %v708 = vsel %vm639, %v705, 0
        %710 = vmatpush.xpose.msra.mxu0 0.0
        %711 = vmatpush.xpose.msra.mxu0 0.0
        %712 = vmatpush.xpose.msra.mxu0 0.0
        %713 = vmatpush.xpose.msra.mxu0 0.0
        %714 = vmatpush.xpose.msra.mxu0 0.0
        %715 = vmatpush.xpose.msra.mxu0 0.0
        %716 = vmatpush.xpose.msra.mxu0 0.0
        %717 = vmatpush.xpose.msra.mxu0 0.0
        %718 = vmatpush.xpose.msra.mxu0 0.0
        %719 = vmatpush.xpose.msra.mxu0 0.0
        %720 = vmatpush.xpose.msra.mxu0 0.0
        %721 = vmatpush.xpose.msra.mxu0 0.0
        %722 = vmatpush.xpose.msra.mxu0 0.0
        %723 = vmatpush.xpose.msra.mxu0 0.0
        %724 = vmatpush.xpose.msra.mxu0 0.0
        %725 = vmatpush.xpose.msra.mxu0 %v708
        %726 = vmatmul.f32.gmra.mxu0 %v706
        %v727 = vpop.f32.mrf.mxu0
        %v728 = vadd.f32 0.0, %v727
        %729 = vdwg.mxu0
        %v730 = vsel %vm639, %v728, -inf
        %731 = vmax.xlane.f32.xlu0 %v730
        %v732 = vpop.xlane.xlu0 %731
        %v733 = vsub.f32 %v728, %v732
        %v734 = vmul.f32 %v733, 1.442695
        %v735 = vpow.pop %v734
        %v736 = vsel %vm639, %v735, 0.0
        %737 = vadd.xlane.f32.xlu0 %v736
        %v738 = vpop.xlane.xlu0 %737
        %v739 = vrcp.pop %v738
        %v740 = vmul.f32 %v735, %v739
        %s741 = scalar_lea.vmem %s531, 8 [#allocation17]
        %742 = vst.msk [vmem:[%s741] sm:$0xff] %vm639, %v740
        %744 = vrot.lane.b32.xlu0 %v638, 120
        %v745 = vpop.permute.xlu0 %744
        %v748 = vsel %vm639, %v740, 0
        %750 = vmatpush.msra.mxu0 0.0
        %751 = vmatpush.msra.mxu0 0.0
        %752 = vmatpush.msra.mxu0 0.0
        %753 = vmatpush.msra.mxu0 0.0
        %754 = vmatpush.msra.mxu0 0.0
        %755 = vmatpush.msra.mxu0 0.0
        %756 = vmatpush.msra.mxu0 0.0
        %757 = vmatpush.msra.mxu0 0.0
        %758 = vmatpush.msra.mxu0 0.0
        %759 = vmatpush.msra.mxu0 0.0
        %760 = vmatpush.msra.mxu0 0.0
        %761 = vmatpush.msra.mxu0 0.0
        %762 = vmatpush.msra.mxu0 0.0
        %763 = vmatpush.msra.mxu0 0.0
        %764 = vmatpush.msra.mxu0 0.0
        %765 = vmatpush.msra.mxu0 %v745
        %766 = vmatmul.f32.gmra.mxu0 %v748
        %v767 = vpop.f32.mrf.mxu0
        %v768 = vadd.f32 0.0, %v767
        %769 = vdwg.mxu0
        %771 = vrot.lane.b32.xlu0 %v768, 8
        %v772 = vpop.permute.xlu0 %771
        %vm774 = vcmask 130112
        %775 = vst.msk [vmem:[#allocation4] sm:$0xff] %vm774, %v772
        %776 = vrot.lane.b32.xlu0 %v636, 112
        %v777 = vpop.permute.xlu0 %776
        %778 = vrot.lane.b32.xlu0 %v637, 112
        %v779 = vpop.permute.xlu0 %778
        %v780 = vsel %vm639, %v777, 0
        %v782 = vsel %vm639, %v779, 0
        %784 = vmatpush.xpose.msra.mxu0 0.0
        %785 = vmatpush.xpose.msra.mxu0 0.0
        %786 = vmatpush.xpose.msra.mxu0 0.0
        %787 = vmatpush.xpose.msra.mxu0 0.0
        %788 = vmatpush.xpose.msra.mxu0 0.0
        %789 = vmatpush.xpose.msra.mxu0 0.0
        %790 = vmatpush.xpose.msra.mxu0 0.0
        %791 = vmatpush.xpose.msra.mxu0 0.0
        %792 = vmatpush.xpose.msra.mxu0 0.0
        %793 = vmatpush.xpose.msra.mxu0 0.0
        %794 = vmatpush.xpose.msra.mxu0 0.0
        %795 = vmatpush.xpose.msra.mxu0 0.0
        %796 = vmatpush.xpose.msra.mxu0 0.0
        %797 = vmatpush.xpose.msra.mxu0 0.0
        %798 = vmatpush.xpose.msra.mxu0 0.0
        %799 = vmatpush.xpose.msra.mxu0 %v782
        %800 = vmatmul.f32.gmra.mxu0 %v780
        %v801 = vpop.f32.mrf.mxu0
        %v802 = vadd.f32 0.0, %v801
        %803 = vdwg.mxu0
        %v804 = vsel %vm639, %v802, -inf
        %805 = vmax.xlane.f32.xlu0 %v804
        %v806 = vpop.xlane.xlu0 %805
        %v807 = vsub.f32 %v802, %v806
        %v808 = vmul.f32 %v807, 1.442695
        %v809 = vpow.pop %v808
        %v810 = vsel %vm639, %v809, 0.0
        %811 = vadd.xlane.f32.xlu0 %v810
        %v812 = vpop.xlane.xlu0 %811
        %v813 = vrcp.pop %v812
        %v814 = vmul.f32 %v809, %v813
        %s815 = scalar_lea.vmem %s531, 16 [#allocation17]
        %816 = vst.msk [vmem:[%s815] sm:$0xff] %vm639, %v814
        %817 = vrot.lane.b32.xlu0 %v638, 112
        %v818 = vpop.permute.xlu0 %817
        %v821 = vsel %vm639, %v814, 0
        %823 = vmatpush.msra.mxu0 0.0
        %824 = vmatpush.msra.mxu0 0.0
        %825 = vmatpush.msra.mxu0 0.0
        %826 = vmatpush.msra.mxu0 0.0
        %827 = vmatpush.msra.mxu0 0.0
        %828 = vmatpush.msra.mxu0 0.0
        %829 = vmatpush.msra.mxu0 0.0
        %830 = vmatpush.msra.mxu0 0.0
        %831 = vmatpush.msra.mxu0 0.0
        %832 = vmatpush.msra.mxu0 0.0
        %833 = vmatpush.msra.mxu0 0.0
        %834 = vmatpush.msra.mxu0 0.0
        %835 = vmatpush.msra.mxu0 0.0
        %836 = vmatpush.msra.mxu0 0.0
        %837 = vmatpush.msra.mxu0 0.0
        %838 = vmatpush.msra.mxu0 %v818
        %839 = vmatmul.f32.gmra.mxu0 %v821
        %v840 = vpop.f32.mrf.mxu0
        %v841 = vadd.f32 0.0, %v840
        %842 = vdwg.mxu0
        %844 = vrot.lane.b32.xlu0 %v841, 16
        %v845 = vpop.permute.xlu0 %844
        %vm847 = vcmask 195712
        %848 = vst.msk [vmem:[#allocation4] sm:$0xff] %vm847, %v845
        %849 = vrot.lane.b32.xlu0 %v636, 104
        %v850 = vpop.permute.xlu0 %849
        %851 = vrot.lane.b32.xlu0 %v637, 104
        %v852 = vpop.permute.xlu0 %851
        %v853 = vsel %vm639, %v850, 0
        %v855 = vsel %vm639, %v852, 0
        %857 = vmatpush.xpose.msra.mxu0 0.0
        %858 = vmatpush.xpose.msra.mxu0 0.0
        %859 = vmatpush.xpose.msra.mxu0 0.0
        %860 = vmatpush.xpose.msra.mxu0 0.0
        %861 = vmatpush.xpose.msra.mxu0 0.0
        %862 = vmatpush.xpose.msra.mxu0 0.0
        %863 = vmatpush.xpose.msra.mxu0 0.0
        %864 = vmatpush.xpose.msra.mxu0 0.0
        %865 = vmatpush.xpose.msra.mxu0 0.0
        %866 = vmatpush.xpose.msra.mxu0 0.0
        %867 = vmatpush.xpose.msra.mxu0 0.0
        %868 = vmatpush.xpose.msra.mxu0 0.0
        %869 = vmatpush.xpose.msra.mxu0 0.0
        %870 = vmatpush.xpose.msra.mxu0 0.0
        %871 = vmatpush.xpose.msra.mxu0 0.0
        %872 = vmatpush.xpose.msra.mxu0 %v855
        %873 = vmatmul.f32.gmra.mxu0 %v853
        %v874 = vpop.f32.mrf.mxu0
        %v875 = vadd.f32 0.0, %v874
        %876 = vdwg.mxu0
        %v877 = vsel %vm639, %v875, -inf
        %878 = vmax.xlane.f32.xlu0 %v877
        %v879 = vpop.xlane.xlu0 %878
        %v880 = vsub.f32 %v875, %v879
        %v881 = vmul.f32 %v880, 1.442695
        %v882 = vpow.pop %v881
        %v883 = vsel %vm639, %v882, 0.0
        %884 = vadd.xlane.f32.xlu0 %v883
        %v885 = vpop.xlane.xlu0 %884
        %v886 = vrcp.pop %v885
        %v887 = vmul.f32 %v882, %v886
        %s888 = scalar_lea.vmem %s531, 24 [#allocation17]
        %889 = vst.msk [vmem:[%s888] sm:$0xff] %vm639, %v887
        %890 = vrot.lane.b32.xlu0 %v638, 104
        %v891 = vpop.permute.xlu0 %890
        %v894 = vsel %vm639, %v887, 0
        %896 = vmatpush.msra.mxu0 0.0
        %897 = vmatpush.msra.mxu0 0.0
        %898 = vmatpush.msra.mxu0 0.0
        %899 = vmatpush.msra.mxu0 0.0
        %900 = vmatpush.msra.mxu0 0.0
        %901 = vmatpush.msra.mxu0 0.0
        %902 = vmatpush.msra.mxu0 0.0
        %903 = vmatpush.msra.mxu0 0.0
        %904 = vmatpush.msra.mxu0 0.0
        %905 = vmatpush.msra.mxu0 0.0
        %906 = vmatpush.msra.mxu0 0.0
        %907 = vmatpush.msra.mxu0 0.0
        %908 = vmatpush.msra.mxu0 0.0
        %909 = vmatpush.msra.mxu0 0.0
        %910 = vmatpush.msra.mxu0 0.0
        %911 = vmatpush.msra.mxu0 %v891
        %912 = vmatmul.f32.gmra.mxu0 %v894
        %v913 = vpop.f32.mrf.mxu0
        %v914 = vadd.f32 0.0, %v913
        %915 = vdwg.mxu0
        %917 = vrot.lane.b32.xlu0 %v914, 24
        %v918 = vpop.permute.xlu0 %917
        %vm920 = vcmask 261312
        %921 = vst.msk [vmem:[#allocation4] sm:$0xff] %vm920, %v918
        %v922 = vld [vmem:[#allocation4] sm:$0xff]
        %923 = vst.msk [vmem:[%s524] sm:$0xff] %vm612, %v922
        %s924 = sand.u32 %s264, 1
        %s925 = scalar_lea.sflag [#allocation7], %s924
        %s926 = sand.u32 %s264, 1
        %s927 = smul.addr %s926, 8
        %s928 = scalar_lea.vmem [#allocation16], %s927
        %s929 = sand.u32 %s292, 1
        %s930 = scalar_lea.sflag [#allocation18], %s929
        %s931 = sand.u32 %s292, 1
        %s932 = smul.addr %s931, 32
        %s933 = scalar_lea.vmem [#allocation17], %s932
        // Predicated region
        $region85: #{tpu_custom_call.1} parent=55 // pred_check
          %p934 = pneg %p274
        $region86: #{tpu_custom_call.1} parent=55 // pred_check_branch
          %936 = sbr.rel (%p934) target = $region88
        $region87: #{tpu_custom_call.1} parent=55 // pred_region
          %938 = vsyncadd %s925, 0
          %s939 = sadd.s32 %s41, %s40
          %s940 = smul.addr %s939, 8
          %s941 = scalar_lea.hbm %s9, %s940
          %s943 = sshll.u32 %s928, 4
          %s944 = int_to_ptr.vmem [resolvable:$true] %s943
          %s945 = sshll.u32 %s941, 4
          %s946 = int_to_ptr.hbm [resolvable:$true] %s945
          %948 = dma.vmem_to_hbm [thread:$0]  %s944, 128, %s946, %s925
        $region88: #{tpu_custom_call.1} parent=55 // pred_fallthru
          _
        // Predicated region
        $region89: #{tpu_custom_call.1} parent=55 // pred_check
          %p949 = pneg %p302
        $region90: #{tpu_custom_call.1} parent=55 // pred_check_branch
          %951 = sbr.rel (%p949) target = $region92
        $region91: #{tpu_custom_call.1} parent=55 // pred_region
          %953 = vsyncadd %s930, 0
          %s954 = sadd.s32 %s41, %s40
          %s955 = smul.addr %s954, 8
          %s956 = scalar_lea.hbm %s10, %s955
          %s957 = sshll.u32 %s933, 4
          %s958 = int_to_ptr.vmem [resolvable:$true] %s957
          %s959 = sshll.u32 %s956, 4
          %s960 = int_to_ptr.hbm [resolvable:$true] %s959
          %965 = dma.vmem_to_hbm [thread:$0]  %s958, 512, %s960, %s930, 128, 256, 8
        $region92: #{tpu_custom_call.1} parent=55 // pred_fallthru
          _
      $region56: #{tpu_custom_call.1} parent=5 // pred_fallthru
        _
      %p966 = scmp.le.s32.totalorder 2, %s31
      // Predicated region
      $region93: #{tpu_custom_call.1} parent=5 // pred_check
        %p967 = pneg %p966
      $region94: #{tpu_custom_call.1} parent=5 // pred_check_branch
        %969 = sbr.rel (%p967) target = $region96
      $region95: #{tpu_custom_call.1} parent=5 // pred_region
        %s970 = ssub.s32 %s31, 2
        // Predicated region
        $region97: #{tpu_custom_call.1} parent=95 // pred_check
          %p971 = pneg %p280
        $region98: #{tpu_custom_call.1} parent=95 // pred_check_branch
          %973 = sbr.rel (%p971) target = $region100
        $region99: #{tpu_custom_call.1} parent=95 // pred_region
          %s974 = sand.u32 %s265, 1
          %s975 = scalar_lea.sflag [#allocation7], %s974
          %s976 = sand.u32 %s265, 1
          %s977 = smul.addr %s976, 8
          %s978 = scalar_lea.vmem [#allocation16], %s977
          %980 = dma.done %s975, 128
        $region100: #{tpu_custom_call.1} parent=95 // pred_fallthru
          _
        // Predicated region
        $region101: #{tpu_custom_call.1} parent=95 // pred_check
          %p981 = pneg %p308
        $region102: #{tpu_custom_call.1} parent=95 // pred_check_branch
          %983 = sbr.rel (%p981) target = $region104
        $region103: #{tpu_custom_call.1} parent=95 // pred_region
          %s984 = sand.u32 %s293, 1
          %s985 = scalar_lea.sflag [#allocation18], %s984
          %s986 = sand.u32 %s293, 1
          %s987 = smul.addr %s986, 32
          %s988 = scalar_lea.vmem [#allocation17], %s987
          %990 = dma.done %s985, 512
        $region104: #{tpu_custom_call.1} parent=95 // pred_fallthru
          _
      $region96: #{tpu_custom_call.1} parent=5 // pred_fallthru
        _
    $region6: #{tpu_custom_call.1} parent=1 // loop_footer
      %s35 = sadd.s32 1, %s31
    $region7: #{tpu_custom_call.1} parent=1 // loop_footer_branch
      %30 = sbr.rel target = $region3
    $region8: #{tpu_custom_call.1} parent=1 // loop_exit
      _
    %991 = vsyncpa [#allocation6], 1
    %s992 = scalar_lea.sflag [#allocation6], 1
    %993 = vsyncpa %s992, 1
    %994 = vsyncpa [#allocation9], 1
    %s995 = scalar_lea.sflag [#allocation9], 1
    %996 = vsyncpa %s995, 1
    %997 = vsyncpa [#allocation12], 1
    %998 = vsyncpa [#allocation15], 1
    %999 = vsyncpa [#allocation7], 1
    %s1000 = scalar_lea.sflag [#allocation7], 1
    %1001 = vsyncpa %s1000, 1
    %1002 = vsyncpa [#allocation18], 1
    %s1003 = scalar_lea.sflag [#allocation18], 1
    %1004 = vsyncpa %s1003, 1

</llo_original>
